<compile_context>
chip_gen: v5e
topology: v5e:2x2
jax: 0.10.0
libtpu: 0.0.40
codegen_flags: <defaults>
</compile_context>

<pallas_src>
import numpy as np

import jax
import jax.numpy as jnp
from jax.experimental import pallas as pl
from jax.experimental.pallas import tpu as pltpu

LEAKY_SLOPE = 0.2
BN_EPS = 1e-5


def _round_up(x, m):
    return (x + m - 1) // m * m


# ------------------------------ fused kernel -------------------------------- #

def _make_kernel(N, ndf):
    chans = [3, ndf, 2 * ndf, 4 * ndf, 8 * ndf]
    spatial = [32, 16, 8, 4]          # input H (=W) of each conv+BN layer

    def kernel(*refs):
        # inputs: x0, 4 x (wcat, gamma128, beta128, pool), w4big, ssum
        x0_ref = refs[0]
        lyr = [refs[1 + 4 * l: 1 + 4 * (l + 1)] for l in range(4)]
        w4big_ref = refs[17]
        ssum_ref = refs[18]
        out_ref = refs[19]
        act = refs[20:23]             # VMEM scratch: padded inputs of layers 1..3

        def conv_bn_lrelu(src_ref, l):
            Hin = spatial[l]
            OH = Hin // 2
            OW = Hin // 2
            slab = Hin + 2            # per-sample rows in the H-padded slab
            wcat_ref, g_ref, b_ref, pool_ref = lyr[l]

            # Gather the 4 vertical taps with stride-2 sublane reads and lane-concat
            # them -> in-VMEM im2col block (N*OH, 4*Kpad).
            taps = []
            for i in range(4):
                per_n = [src_ref[pl.ds(n * slab + i, OH, stride=2), :]
                         for n in range(N)]
                taps.append(per_n[0] if N == 1 else jnp.concatenate(per_n, axis=0))
            xcat = jnp.concatenate(taps, axis=1).astype(jnp.bfloat16)

            # One bf16 MXU matmul per layer, f32 accumulation.
            acc = jnp.dot(xcat, wcat_ref[...],
                          preferred_element_type=jnp.float32)     # (N*OH, OW*Cout) f32

            # Training-mode BatchNorm over (N, OH, OW) per channel.
            # Row sums on the MXU (ones-vector matmul), then fold the OW lane-groups of
            # each channel with the 0/1 pool matrix (also MXU), all in f32.
            ones_r = jnp.ones((1, N * OH), jnp.float32)
            s1 = jnp.dot(ones_r, acc, preferred_element_type=jnp.float32)        # (1, L)
            s2 = jnp.dot(ones_r, acc * acc, preferred_element_type=jnp.float32)  # (1, L)
            inv_cnt = 1.0 / float(N * OH * OW)
            mean = jnp.dot(s1, pool_ref[...], preferred_element_type=jnp.float32) * inv_cnt
            ex2 = jnp.dot(s2, pool_ref[...], preferred_element_type=jnp.float32) * inv_cnt
            var = ex2 - mean * mean                                 # biased var (torch BN train)
            scale = g_ref[...] * jax.lax.rsqrt(var + BN_EPS)        # (1, L)
            shift = b_ref[...] - mean * scale
            z = acc * scale + shift
            return jnp.where(z >= 0, z, LEAKY_SLOPE * z)            # (N*OH, L) f32

        # layer 0 reads straight from the (already padded, lane-dense) input slab
        h = conv_bn_lrelu(x0_ref, 0)

        # layers 1..3: write the activation into an H-padded VMEM slab, then conv it
        for l in range(1, 4):
            dst = act[l - 1]
            rows = spatial[l]                  # per-sample interior rows
            slab = rows + 2
            L_prev = h.shape[1]
            dst[...] = jnp.zeros_like(dst)     # zero pad rows (and any lane padding)
            for n in range(N):
                dst[n * slab + 1: n * slab + 1 + rows, 0:L_prev] = \
                    h[n * rows:(n + 1) * rows, :]
            h = conv_bn_lrelu(dst, l)

        # Final Conv2d(8*ndf, 1, 2, 1, 0) as an epilogue: elementwise multiply with the
        # lane-dense weight slab, pair-sum the two rows per sample (tiny matmul), then a
        # lane reduce -> one scalar per sample.  (sigmoid=False -> Identity.)
        prod = h * w4big_ref[...]                                            # (2N, L)
        per_n = jnp.dot(ssum_ref[...], prod, preferred_element_type=jnp.float32)  # (N, L)
        out_ref[...] = jnp.sum(per_n, axis=-1, keepdims=True)                # (N, 1)

    return kernel


# ------------------------- host-side weight folding ------------------------- #

def prepare_params(params):
    """One-time host preprocessing: fold conv weights / BN affine params into the
    lane-dense matmul form the fused kernel consumes."""
    ndf = int(params["gamma0"].shape[0])
    chans = [3, ndf, 2 * ndf, 4 * ndf, 8 * ndf]
    spatial = [32, 16, 8, 4]
    prep = {}
    for l in range(4):
        w = np.asarray(params[f"conv{l}"], np.float32)       # (Cout, Cin, 4, 4)
        Cout, Cin = chans[l + 1], chans[l]
        Win = spatial[l]
        OW = Win // 2
        Ktap = Win * Cin
        Kpad = _round_up(Ktap, 128)                          # lane-aligned K per tap
        L = OW * Cout                                        # lane-dense output width
        wcat = np.zeros((4 * Kpad, L), np.float32)
        for i in range(4):                                   # vertical tap
            for ow in range(OW):
                for j in range(4):                           # horizontal tap
                    wc = 2 * ow + j - 1                      # unpadded input column
                    if 0 <= wc < Win:
                        wcat[i * Kpad + wc * Cin: i * Kpad + wc * Cin + Cin,
                             ow * Cout:(ow + 1) * Cout] = w[:, :, i, j].T
        prep[f"wcat{l}"] = jnp.asarray(wcat, jnp.bfloat16)
        g = np.asarray(params[f"gamma{l}"], np.float32)
        b = np.asarray(params[f"beta{l}"], np.float32)
        prep[f"g128_{l}"] = jnp.asarray(np.tile(g, OW)[None, :], jnp.float32)
        prep[f"b128_{l}"] = jnp.asarray(np.tile(b, OW)[None, :], jnp.float32)
        prep[f"pool{l}"] = jnp.asarray(
            np.tile(np.eye(Cout, dtype=np.float32), (OW, OW)))
    w4 = np.asarray(params["conv4"], np.float32)             # (1, 8*ndf, 2, 2)
    C4 = w4.shape[1]
    # w4row[i, j*C4 + c] = w4[0, c, i, j]   (matches the lane-dense layer-3 output)
    prep["w4row"] = jnp.asarray(
        np.transpose(w4[0], (1, 2, 0)).reshape(2, 2 * C4), jnp.float32)
    return prep


# ------------------------------ forward (jit) ------------------------------- #

@jax.jit
def cifar_disc_forward(x, prep):
    # x: (N, 3, 32, 32) NCHW, as in PyTorch.
    N = x.shape[0]
    assert x.shape[1:] == (3, 32, 32), x.shape
    ndf = prep["g128_0"].shape[1] // 16
    chans = [3, ndf, 2 * ndf, 4 * ndf, 8 * ndf]
    spatial = [32, 16, 8, 4]

    # Lane-dense, H-padded input slab: (N*34, 128); lane = w*3 + c (zero-padded 96->128).
    x_rows = jnp.transpose(x, (0, 2, 3, 1)).reshape(N, 32, 32 * 3)
    x_rows = jnp.pad(x_rows, ((0, 0), (1, 1), (0, 128 - 32 * 3)))
    x0 = x_rows.reshape(N * 34, 128)

    # Batch-size-dependent constants for the fused final-conv epilogue.
    w4big = jnp.tile(prep["w4row"], (N, 1))                              # (2N, 2*8*ndf)
    ssum = jnp.asarray(np.kron(np.eye(N, dtype=np.float32),
                               np.ones((1, 2), np.float32)))             # (N, 2N)

    inputs = [x0]
    for l in range(4):
        inputs += [prep[f"wcat{l}"], prep[f"g128_{l}"],
                   prep[f"b128_{l}"], prep[f"pool{l}"]]
    inputs += [w4big, ssum]

    in_specs = [pl.BlockSpec(a.shape, lambda i: (0, 0)) for a in inputs]
    scratch_shapes = [
        pltpu.VMEM((N * (spatial[l] + 2), _round_up(spatial[l] * chans[l], 128)),
                   jnp.float32)
        for l in (1, 2, 3)
    ]

    out = pl.pallas_call(
        _make_kernel(N, ndf),
        out_shape=jax.ShapeDtypeStruct((N, 1), jnp.float32),
        grid=(1,),
        in_specs=in_specs,
        out_specs=pl.BlockSpec((N, 1), lambda i: (0, 0)),
        scratch_shapes=scratch_shapes,
        compiler_params=pltpu.CompilerParams(
            dimension_semantics=("arbitrary",)),
    )(*inputs)
    return out.reshape(-1)                                   # .view(-1, 1).squeeze(1)


# --------------------------- pure-JAX reference ----------------------------- #

def ref_forward(x, params):
    h = x
    dn = ("NCHW", "OIHW", "NCHW")
    for li in range(4):
        w = params[f"conv{li}"]
        h = jax.lax.conv_general_dilated(h, w, (2, 2), ((1, 1), (1, 1)),
                                         dimension_numbers=dn)
        mean = jnp.mean(h, axis=(0, 2, 3), keepdims=True)
        var = jnp.mean((h - mean) ** 2, axis=(0, 2, 3), keepdims=True)
        g = params[f"gamma{li}"].reshape(1, -1, 1, 1)
        b = params[f"beta{li}"].reshape(1, -1, 1, 1)
        h = (h - mean) * jax.lax.rsqrt(var + BN_EPS) * g + b
        h = jnp.where(h >= 0, h, LEAKY_SLOPE * h)
    h = jax.lax.conv_general_dilated(h, params["conv4"], (1, 1), ((0, 0), (0, 0)),
                                     dimension_numbers=dn)
    return h.reshape(-1)


# ---------------------------------- main ------------------------------------ #

def make_params(ndf, key):
    chans = [3, ndf, ndf * 2, ndf * 4, ndf * 8]
    keys = jax.random.split(key, 16)
    params = {}
    for i in range(4):
        params[f"conv{i}"] = 0.02 * jax.random.normal(
            keys[i], (chans[i + 1], chans[i], 4, 4), jnp.float32)
        params[f"gamma{i}"] = 1.0 + 0.1 * jax.random.normal(
            keys[4 + i], (chans[i + 1],), jnp.float32)
        params[f"beta{i}"] = 0.1 * jax.random.normal(
            keys[8 + i], (chans[i + 1],), jnp.float32)
    params["conv4"] = 0.02 * jax.random.normal(
        keys[12], (1, ndf * 8, 2, 2), jnp.float32)
    return params, keys[13]


if __name__ == "__main__":
    ndf = 8           # OW*Cout == 128 at every BN layer -> fully lane-dense activations
    batch = 2
    params, xkey = make_params(ndf, jax.random.PRNGKey(0))
    x = jax.random.normal(xkey, (batch, 3, 32, 32), jnp.float32)

    prep = prepare_params(params)
    out = jax.block_until_ready(cifar_disc_forward(x, prep))
    assert out.shape == (batch,), out.shape

    ref = jax.block_until_ready(ref_forward(x, params))
    # bf16 MXU inputs (f32 accumulation / f32 BN) -> slightly looser tolerance than pure f32.
    assert jnp.allclose(out, ref, rtol=2e-2, atol=3e-2), (out, ref)

    print("KERNEL_OK")
</pallas_src>

<mosaic_0001>
module attributes {stable_mosaic.version = 11 : i64} {
  func.func @kernel(%arg0: i32, %arg1: memref<68x128xf32, #tpu.memory_space<vmem>>, %arg2: memref<512x128xbf16, #tpu.memory_space<vmem>>, %arg3: memref<1x128xf32, #tpu.memory_space<vmem>>, %arg4: memref<1x128xf32, #tpu.memory_space<vmem>>, %arg5: memref<128x128xf32, #tpu.memory_space<vmem>>, %arg6: memref<512x128xbf16, #tpu.memory_space<vmem>>, %arg7: memref<1x128xf32, #tpu.memory_space<vmem>>, %arg8: memref<1x128xf32, #tpu.memory_space<vmem>>, %arg9: memref<128x128xf32, #tpu.memory_space<vmem>>, %arg10: memref<512x128xbf16, #tpu.memory_space<vmem>>, %arg11: memref<1x128xf32, #tpu.memory_space<vmem>>, %arg12: memref<1x128xf32, #tpu.memory_space<vmem>>, %arg13: memref<128x128xf32, #tpu.memory_space<vmem>>, %arg14: memref<512x128xbf16, #tpu.memory_space<vmem>>, %arg15: memref<1x128xf32, #tpu.memory_space<vmem>>, %arg16: memref<1x128xf32, #tpu.memory_space<vmem>>, %arg17: memref<128x128xf32, #tpu.memory_space<vmem>>, %arg18: memref<4x128xf32, #tpu.memory_space<vmem>>, %arg19: memref<2x4xf32, #tpu.memory_space<vmem>>, %arg20: memref<2x1xf32, #tpu.memory_space<vmem>>, %arg21: memref<36x128xf32, #tpu.memory_space<vmem>>, %arg22: memref<20x128xf32, #tpu.memory_space<vmem>>, %arg23: memref<12x128xf32, #tpu.memory_space<vmem>>) attributes {dimension_semantics = [#tpu.dimension_semantics<arbitrary>], iteration_bounds = array<i64: 1>, scalar_prefetch = 0 : i64, scratch_operands = 3 : i64, tpu.core_type = #tpu.core_type<tc>, window_params = [{pipeline_mode = #tpu.pipeline_mode<synchronous>, transform_indices = @transform_0, window_bounds = array<i64: 68, 128>}, {pipeline_mode = #tpu.pipeline_mode<synchronous>, transform_indices = @transform_1, window_bounds = array<i64: 512, 128>}, {pipeline_mode = #tpu.pipeline_mode<synchronous>, transform_indices = @transform_2, window_bounds = array<i64: 1, 128>}, {pipeline_mode = #tpu.pipeline_mode<synchronous>, transform_indices = @transform_3, window_bounds = array<i64: 1, 128>}, {pipeline_mode = #tpu.pipeline_mode<synchronous>, transform_indices = @transform_4, window_bounds = array<i64: 128, 128>}, {pipeline_mode = #tpu.pipeline_mode<synchronous>, transform_indices = @transform_5, window_bounds = array<i64: 512, 128>}, {pipeline_mode = #tpu.pipeline_mode<synchronous>, transform_indices = @transform_6, window_bounds = array<i64: 1, 128>}, {pipeline_mode = #tpu.pipeline_mode<synchronous>, transform_indices = @transform_7, window_bounds = array<i64: 1, 128>}, {pipeline_mode = #tpu.pipeline_mode<synchronous>, transform_indices = @transform_8, window_bounds = array<i64: 128, 128>}, {pipeline_mode = #tpu.pipeline_mode<synchronous>, transform_indices = @transform_9, window_bounds = array<i64: 512, 128>}, {pipeline_mode = #tpu.pipeline_mode<synchronous>, transform_indices = @transform_10, window_bounds = array<i64: 1, 128>}, {pipeline_mode = #tpu.pipeline_mode<synchronous>, transform_indices = @transform_11, window_bounds = array<i64: 1, 128>}, {pipeline_mode = #tpu.pipeline_mode<synchronous>, transform_indices = @transform_12, window_bounds = array<i64: 128, 128>}, {pipeline_mode = #tpu.pipeline_mode<synchronous>, transform_indices = @transform_13, window_bounds = array<i64: 512, 128>}, {pipeline_mode = #tpu.pipeline_mode<synchronous>, transform_indices = @transform_14, window_bounds = array<i64: 1, 128>}, {pipeline_mode = #tpu.pipeline_mode<synchronous>, transform_indices = @transform_15, window_bounds = array<i64: 1, 128>}, {pipeline_mode = #tpu.pipeline_mode<synchronous>, transform_indices = @transform_16, window_bounds = array<i64: 128, 128>}, {pipeline_mode = #tpu.pipeline_mode<synchronous>, transform_indices = @transform_17, window_bounds = array<i64: 4, 128>}, {pipeline_mode = #tpu.pipeline_mode<synchronous>, transform_indices = @transform_18, window_bounds = array<i64: 2, 4>}, {pipeline_mode = #tpu.pipeline_mode<synchronous>, transform_indices = @transform_19, window_bounds = array<i64: 2, 1>}]} {
    %c0 = arith.constant 0 : index
    %c0_0 = arith.constant 0 : index
    %0 = tpu.strided_load %arg1[%c0, %c0_0] {strides = array<i32: 2, 1>} : memref<68x128xf32, #tpu.memory_space<vmem>>, vector<16x128xf32>
    %c34 = arith.constant 34 : index
    %c0_1 = arith.constant 0 : index
    %1 = tpu.strided_load %arg1[%c34, %c0_1] {strides = array<i32: 2, 1>} : memref<68x128xf32, #tpu.memory_space<vmem>>, vector<16x128xf32>
    %2 = tpu.concatenate %0, %1 in 0 : vector<16x128xf32>, vector<16x128xf32> -> vector<32x128xf32>
    %c1 = arith.constant 1 : index
    %c0_2 = arith.constant 0 : index
    %3 = tpu.strided_load %arg1[%c1, %c0_2] {strides = array<i32: 2, 1>} : memref<68x128xf32, #tpu.memory_space<vmem>>, vector<16x128xf32>
    %c35 = arith.constant 35 : index
    %c0_3 = arith.constant 0 : index
    %4 = tpu.strided_load %arg1[%c35, %c0_3] {strides = array<i32: 2, 1>} : memref<68x128xf32, #tpu.memory_space<vmem>>, vector<16x128xf32>
    %5 = tpu.concatenate %3, %4 in 0 : vector<16x128xf32>, vector<16x128xf32> -> vector<32x128xf32>
    %c2 = arith.constant 2 : index
    %c0_4 = arith.constant 0 : index
    %6 = tpu.strided_load %arg1[%c2, %c0_4] {strides = array<i32: 2, 1>} : memref<68x128xf32, #tpu.memory_space<vmem>>, vector<16x128xf32>
    %c36 = arith.constant 36 : index
    %c0_5 = arith.constant 0 : index
    %7 = tpu.strided_load %arg1[%c36, %c0_5] {strides = array<i32: 2, 1>} : memref<68x128xf32, #tpu.memory_space<vmem>>, vector<16x128xf32>
    %8 = tpu.concatenate %6, %7 in 0 : vector<16x128xf32>, vector<16x128xf32> -> vector<32x128xf32>
    %c3 = arith.constant 3 : index
    %c0_6 = arith.constant 0 : index
    %9 = tpu.strided_load %arg1[%c3, %c0_6] {strides = array<i32: 2, 1>} : memref<68x128xf32, #tpu.memory_space<vmem>>, vector<16x128xf32>
    %c37 = arith.constant 37 : index
    %c0_7 = arith.constant 0 : index
    %10 = tpu.strided_load %arg1[%c37, %c0_7] {strides = array<i32: 2, 1>} : memref<68x128xf32, #tpu.memory_space<vmem>>, vector<16x128xf32>
    %11 = tpu.concatenate %9, %10 in 0 : vector<16x128xf32>, vector<16x128xf32> -> vector<32x128xf32>
    %12 = tpu.concatenate %2, %5, %8, %11 in 1 : vector<32x128xf32>, vector<32x128xf32>, vector<32x128xf32>, vector<32x128xf32> -> vector<32x512xf32>
    %13 = arith.truncf %12 : vector<32x512xf32> to vector<32x512xbf16>
    %c0_8 = arith.constant 0 : index
    %c0_9 = arith.constant 0 : index
    %14 = vector.load %arg2[%c0_8, %c0_9] : memref<512x128xbf16, #tpu.memory_space<vmem>>, vector<512x128xbf16>
    %cst = arith.constant dense<0.000000e+00> : vector<32x128xf32>
    %15 = tpu.matmul %13, %14, %cst {dimension_numbers = #tpu.dot_dimension_numbers<[1], [0], [0], [1], [0, 0, 1, 1], [], []>} : vector<32x512xbf16>, vector<512x128xbf16>, vector<32x128xf32> -> vector<32x128xf32>
    %cst_10 = arith.constant 1.000000e+00 : f32
    %16 = vector.broadcast %cst_10 : f32 to vector<1x32xf32>
    %cst_11 = arith.constant dense<0.000000e+00> : vector<1x128xf32>
    %17 = tpu.matmul %16, %15, %cst_11 {dimension_numbers = #tpu.dot_dimension_numbers<[1], [0], [0], [1], [0, 0, 1, 1], [], []>} : vector<1x32xf32>, vector<32x128xf32>, vector<1x128xf32> -> vector<1x128xf32>
    %18 = arith.mulf %15, %15 : vector<32x128xf32>
    %cst_12 = arith.constant dense<0.000000e+00> : vector<1x128xf32>
    %19 = tpu.matmul %16, %18, %cst_12 {dimension_numbers = #tpu.dot_dimension_numbers<[1], [0], [0], [1], [0, 0, 1, 1], [], []>} : vector<1x32xf32>, vector<32x128xf32>, vector<1x128xf32> -> vector<1x128xf32>
    %c0_13 = arith.constant 0 : index
    %c0_14 = arith.constant 0 : index
    %20 = vector.load %arg5[%c0_13, %c0_14] : memref<128x128xf32, #tpu.memory_space<vmem>>, vector<128x128xf32>
    %cst_15 = arith.constant dense<0.000000e+00> : vector<1x128xf32>
    %21 = tpu.matmul %17, %20, %cst_15 {dimension_numbers = #tpu.dot_dimension_numbers<[1], [0], [0], [1], [0, 0, 1, 1], [], []>} : vector<1x128xf32>, vector<128x128xf32>, vector<1x128xf32> -> vector<1x128xf32>
    %cst_16 = arith.constant 0.001953125 : f32
    %22 = vector.broadcast %cst_16 : f32 to vector<1x128xf32>
    %23 = arith.mulf %21, %22 : vector<1x128xf32>
    %c0_17 = arith.constant 0 : index
    %c0_18 = arith.constant 0 : index
    %24 = vector.load %arg5[%c0_17, %c0_18] : memref<128x128xf32, #tpu.memory_space<vmem>>, vector<128x128xf32>
    %cst_19 = arith.constant dense<0.000000e+00> : vector<1x128xf32>
    %25 = tpu.matmul %19, %24, %cst_19 {dimension_numbers = #tpu.dot_dimension_numbers<[1], [0], [0], [1], [0, 0, 1, 1], [], []>} : vector<1x128xf32>, vector<128x128xf32>, vector<1x128xf32> -> vector<1x128xf32>
    %cst_20 = arith.constant 0.001953125 : f32
    %26 = vector.broadcast %cst_20 : f32 to vector<1x128xf32>
    %27 = arith.mulf %25, %26 : vector<1x128xf32>
    %28 = arith.mulf %23, %23 : vector<1x128xf32>
    %29 = arith.subf %27, %28 : vector<1x128xf32>
    %c0_21 = arith.constant 0 : index
    %c0_22 = arith.constant 0 : index
    %30 = vector.load %arg3[%c0_21, %c0_22] : memref<1x128xf32, #tpu.memory_space<vmem>>, vector<1x128xf32>
    %cst_23 = arith.constant 9.99999974E-6 : f32
    %31 = vector.broadcast %cst_23 : f32 to vector<1x128xf32>
    %32 = arith.addf %29, %31 : vector<1x128xf32>
    %33 = math.rsqrt %32 : vector<1x128xf32>
    %34 = arith.mulf %30, %33 : vector<1x128xf32>
    %c0_24 = arith.constant 0 : index
    %c0_25 = arith.constant 0 : index
    %35 = vector.load %arg4[%c0_24, %c0_25] : memref<1x128xf32, #tpu.memory_space<vmem>>, vector<1x128xf32>
    %36 = arith.mulf %23, %34 : vector<1x128xf32>
    %37 = arith.subf %35, %36 : vector<1x128xf32>
    %38 = vector.broadcast %34 : vector<1x128xf32> to vector<32x128xf32>
    %39 = arith.mulf %15, %38 : vector<32x128xf32>
    %40 = vector.broadcast %37 : vector<1x128xf32> to vector<32x128xf32>
    %41 = arith.addf %39, %40 : vector<32x128xf32>
    %cst_26 = arith.constant 0.000000e+00 : f32
    %42 = vector.broadcast %cst_26 : f32 to vector<32x128xf32>
    %43 = arith.cmpf oge, %41, %42 : vector<32x128xf32>
    %cst_27 = arith.constant 2.000000e-01 : f32
    %44 = vector.broadcast %cst_27 : f32 to vector<32x128xf32>
    %45 = arith.mulf %44, %41 : vector<32x128xf32>
    %46 = arith.select %43, %41, %45 : vector<32x128xi1>, vector<32x128xf32>
    %cst_28 = arith.constant 0.000000e+00 : f32
    %47 = vector.broadcast %cst_28 : f32 to vector<36x128xf32>
    %c0_29 = arith.constant 0 : index
    %c0_30 = arith.constant 0 : index
    %48 = vector.load %arg21[%c0_29, %c0_30] : memref<36x128xf32, #tpu.memory_space<vmem>>, vector<36x128xf32>
    tpu.vector_store %arg21[%c0_29, %c0_30], %47 {strides = array<i32>} : memref<36x128xf32, #tpu.memory_space<vmem>>, vector<36x128xf32>,
    %49 = vector.extract_strided_slice %46 {offsets = [0, 0], sizes = [16, 128], strides = [1, 1]} : vector<32x128xf32> to vector<16x128xf32>
    %c1_31 = arith.constant 1 : index
    %c0_32 = arith.constant 0 : index
    %50 = vector.load %arg21[%c1_31, %c0_32] : memref<36x128xf32, #tpu.memory_space<vmem>>, vector<16x128xf32>
    tpu.vector_store %arg21[%c1_31, %c0_32], %49 {strides = array<i32>} : memref<36x128xf32, #tpu.memory_space<vmem>>, vector<16x128xf32>,
    %51 = vector.extract_strided_slice %46 {offsets = [16, 0], sizes = [16, 128], strides = [1, 1]} : vector<32x128xf32> to vector<16x128xf32>
    %c19 = arith.constant 19 : index
    %c0_33 = arith.constant 0 : index
    %52 = vector.load %arg21[%c19, %c0_33] : memref<36x128xf32, #tpu.memory_space<vmem>>, vector<16x128xf32>
    tpu.vector_store %arg21[%c19, %c0_33], %51 {strides = array<i32>} : memref<36x128xf32, #tpu.memory_space<vmem>>, vector<16x128xf32>,
    %c0_34 = arith.constant 0 : index
    %c0_35 = arith.constant 0 : index
    %53 = tpu.strided_load %arg21[%c0_34, %c0_35] {strides = array<i32: 2, 1>} : memref<36x128xf32, #tpu.memory_space<vmem>>, vector<8x128xf32>
    %c18 = arith.constant 18 : index
    %c0_36 = arith.constant 0 : index
    %54 = tpu.strided_load %arg21[%c18, %c0_36] {strides = array<i32: 2, 1>} : memref<36x128xf32, #tpu.memory_space<vmem>>, vector<8x128xf32>
    %55 = tpu.concatenate %53, %54 in 0 : vector<8x128xf32>, vector<8x128xf32> -> vector<16x128xf32>
    %c1_37 = arith.constant 1 : index
    %c0_38 = arith.constant 0 : index
    %56 = tpu.strided_load %arg21[%c1_37, %c0_38] {strides = array<i32: 2, 1>} : memref<36x128xf32, #tpu.memory_space<vmem>>, vector<8x128xf32>
    %c19_39 = arith.constant 19 : index
    %c0_40 = arith.constant 0 : index
    %57 = tpu.strided_load %arg21[%c19_39, %c0_40] {strides = array<i32: 2, 1>} : memref<36x128xf32, #tpu.memory_space<vmem>>, vector<8x128xf32>
    %58 = tpu.concatenate %56, %57 in 0 : vector<8x128xf32>, vector<8x128xf32> -> vector<16x128xf32>
    %c2_41 = arith.constant 2 : index
    %c0_42 = arith.constant 0 : index
    %59 = tpu.strided_load %arg21[%c2_41, %c0_42] {strides = array<i32: 2, 1>} : memref<36x128xf32, #tpu.memory_space<vmem>>, vector<8x128xf32>
    %c20 = arith.constant 20 : index
    %c0_43 = arith.constant 0 : index
    %60 = tpu.strided_load %arg21[%c20, %c0_43] {strides = array<i32: 2, 1>} : memref<36x128xf32, #tpu.memory_space<vmem>>, vector<8x128xf32>
    %61 = tpu.concatenate %59, %60 in 0 : vector<8x128xf32>, vector<8x128xf32> -> vector<16x128xf32>
    %c3_44 = arith.constant 3 : index
    %c0_45 = arith.constant 0 : index
    %62 = tpu.strided_load %arg21[%c3_44, %c0_45] {strides = array<i32: 2, 1>} : memref<36x128xf32, #tpu.memory_space<vmem>>, vector<8x128xf32>
    %c21 = arith.constant 21 : index
    %c0_46 = arith.constant 0 : index
    %63 = tpu.strided_load %arg21[%c21, %c0_46] {strides = array<i32: 2, 1>} : memref<36x128xf32, #tpu.memory_space<vmem>>, vector<8x128xf32>
    %64 = tpu.concatenate %62, %63 in 0 : vector<8x128xf32>, vector<8x128xf32> -> vector<16x128xf32>
    %65 = tpu.concatenate %55, %58, %61, %64 in 1 : vector<16x128xf32>, vector<16x128xf32>, vector<16x128xf32>, vector<16x128xf32> -> vector<16x512xf32>
    %66 = arith.truncf %65 : vector<16x512xf32> to vector<16x512xbf16>
    %c0_47 = arith.constant 0 : index
    %c0_48 = arith.constant 0 : index
    %67 = vector.load %arg6[%c0_47, %c0_48] : memref<512x128xbf16, #tpu.memory_space<vmem>>, vector<512x128xbf16>
    %cst_49 = arith.constant dense<0.000000e+00> : vector<16x128xf32>
    %68 = tpu.matmul %66, %67, %cst_49 {dimension_numbers = #tpu.dot_dimension_numbers<[1], [0], [0], [1], [0, 0, 1, 1], [], []>} : vector<16x512xbf16>, vector<512x128xbf16>, vector<16x128xf32> -> vector<16x128xf32>
    %cst_50 = arith.constant 1.000000e+00 : f32
    %69 = vector.broadcast %cst_50 : f32 to vector<1x16xf32>
    %cst_51 = arith.constant dense<0.000000e+00> : vector<1x128xf32>
    %70 = tpu.matmul %69, %68, %cst_51 {dimension_numbers = #tpu.dot_dimension_numbers<[1], [0], [0], [1], [0, 0, 1, 1], [], []>} : vector<1x16xf32>, vector<16x128xf32>, vector<1x128xf32> -> vector<1x128xf32>
    %71 = arith.mulf %68, %68 : vector<16x128xf32>
    %cst_52 = arith.constant dense<0.000000e+00> : vector<1x128xf32>
    %72 = tpu.matmul %69, %71, %cst_52 {dimension_numbers = #tpu.dot_dimension_numbers<[1], [0], [0], [1], [0, 0, 1, 1], [], []>} : vector<1x16xf32>, vector<16x128xf32>, vector<1x128xf32> -> vector<1x128xf32>
    %c0_53 = arith.constant 0 : index
    %c0_54 = arith.constant 0 : index
    %73 = vector.load %arg9[%c0_53, %c0_54] : memref<128x128xf32, #tpu.memory_space<vmem>>, vector<128x128xf32>
    %cst_55 = arith.constant dense<0.000000e+00> : vector<1x128xf32>
    %74 = tpu.matmul %70, %73, %cst_55 {dimension_numbers = #tpu.dot_dimension_numbers<[1], [0], [0], [1], [0, 0, 1, 1], [], []>} : vector<1x128xf32>, vector<128x128xf32>, vector<1x128xf32> -> vector<1x128xf32>
    %cst_56 = arith.constant 7.812500e-03 : f32
    %75 = vector.broadcast %cst_56 : f32 to vector<1x128xf32>
    %76 = arith.mulf %74, %75 : vector<1x128xf32>
    %c0_57 = arith.constant 0 : index
    %c0_58 = arith.constant 0 : index
    %77 = vector.load %arg9[%c0_57, %c0_58] : memref<128x128xf32, #tpu.memory_space<vmem>>, vector<128x128xf32>
    %cst_59 = arith.constant dense<0.000000e+00> : vector<1x128xf32>
    %78 = tpu.matmul %72, %77, %cst_59 {dimension_numbers = #tpu.dot_dimension_numbers<[1], [0], [0], [1], [0, 0, 1, 1], [], []>} : vector<1x128xf32>, vector<128x128xf32>, vector<1x128xf32> -> vector<1x128xf32>
    %cst_60 = arith.constant 7.812500e-03 : f32
    %79 = vector.broadcast %cst_60 : f32 to vector<1x128xf32>
    %80 = arith.mulf %78, %79 : vector<1x128xf32>
    %81 = arith.mulf %76, %76 : vector<1x128xf32>
    %82 = arith.subf %80, %81 : vector<1x128xf32>
    %c0_61 = arith.constant 0 : index
    %c0_62 = arith.constant 0 : index
    %83 = vector.load %arg7[%c0_61, %c0_62] : memref<1x128xf32, #tpu.memory_space<vmem>>, vector<1x128xf32>
    %cst_63 = arith.constant 9.99999974E-6 : f32
    %84 = vector.broadcast %cst_63 : f32 to vector<1x128xf32>
    %85 = arith.addf %82, %84 : vector<1x128xf32>
    %86 = math.rsqrt %85 : vector<1x128xf32>
    %87 = arith.mulf %83, %86 : vector<1x128xf32>
    %c0_64 = arith.constant 0 : index
    %c0_65 = arith.constant 0 : index
    %88 = vector.load %arg8[%c0_64, %c0_65] : memref<1x128xf32, #tpu.memory_space<vmem>>, vector<1x128xf32>
    %89 = arith.mulf %76, %87 : vector<1x128xf32>
    %90 = arith.subf %88, %89 : vector<1x128xf32>
    %91 = vector.broadcast %87 : vector<1x128xf32> to vector<16x128xf32>
    %92 = arith.mulf %68, %91 : vector<16x128xf32>
    %93 = vector.broadcast %90 : vector<1x128xf32> to vector<16x128xf32>
    %94 = arith.addf %92, %93 : vector<16x128xf32>
    %cst_66 = arith.constant 0.000000e+00 : f32
    %95 = vector.broadcast %cst_66 : f32 to vector<16x128xf32>
    %96 = arith.cmpf oge, %94, %95 : vector<16x128xf32>
    %cst_67 = arith.constant 2.000000e-01 : f32
    %97 = vector.broadcast %cst_67 : f32 to vector<16x128xf32>
    %98 = arith.mulf %97, %94 : vector<16x128xf32>
    %99 = arith.select %96, %94, %98 : vector<16x128xi1>, vector<16x128xf32>
    %cst_68 = arith.constant 0.000000e+00 : f32
    %100 = vector.broadcast %cst_68 : f32 to vector<20x128xf32>
    %c0_69 = arith.constant 0 : index
    %c0_70 = arith.constant 0 : index
    %101 = vector.load %arg22[%c0_69, %c0_70] : memref<20x128xf32, #tpu.memory_space<vmem>>, vector<20x128xf32>
    tpu.vector_store %arg22[%c0_69, %c0_70], %100 {strides = array<i32>} : memref<20x128xf32, #tpu.memory_space<vmem>>, vector<20x128xf32>,
    %102 = vector.extract_strided_slice %99 {offsets = [0, 0], sizes = [8, 128], strides = [1, 1]} : vector<16x128xf32> to vector<8x128xf32>
    %c1_71 = arith.constant 1 : index
    %c0_72 = arith.constant 0 : index
    %103 = vector.load %arg22[%c1_71, %c0_72] : memref<20x128xf32, #tpu.memory_space<vmem>>, vector<8x128xf32>
    tpu.vector_store %arg22[%c1_71, %c0_72], %102 {strides = array<i32>} : memref<20x128xf32, #tpu.memory_space<vmem>>, vector<8x128xf32>,
    %104 = vector.extract_strided_slice %99 {offsets = [8, 0], sizes = [8, 128], strides = [1, 1]} : vector<16x128xf32> to vector<8x128xf32>
    %c11 = arith.constant 11 : index
    %c0_73 = arith.constant 0 : index
    %105 = vector.load %arg22[%c11, %c0_73] : memref<20x128xf32, #tpu.memory_space<vmem>>, vector<8x128xf32>
    tpu.vector_store %arg22[%c11, %c0_73], %104 {strides = array<i32>} : memref<20x128xf32, #tpu.memory_space<vmem>>, vector<8x128xf32>,
    %c0_74 = arith.constant 0 : index
    %c0_75 = arith.constant 0 : index
    %106 = tpu.strided_load %arg22[%c0_74, %c0_75] {strides = array<i32: 2, 1>} : memref<20x128xf32, #tpu.memory_space<vmem>>, vector<4x128xf32>
    %c10 = arith.constant 10 : index
    %c0_76 = arith.constant 0 : index
    %107 = tpu.strided_load %arg22[%c10, %c0_76] {strides = array<i32: 2, 1>} : memref<20x128xf32, #tpu.memory_space<vmem>>, vector<4x128xf32>
    %108 = tpu.concatenate %106, %107 in 0 : vector<4x128xf32>, vector<4x128xf32> -> vector<8x128xf32>
    %c1_77 = arith.constant 1 : index
    %c0_78 = arith.constant 0 : index
    %109 = tpu.strided_load %arg22[%c1_77, %c0_78] {strides = array<i32: 2, 1>} : memref<20x128xf32, #tpu.memory_space<vmem>>, vector<4x128xf32>
    %c11_79 = arith.constant 11 : index
    %c0_80 = arith.constant 0 : index
    %110 = tpu.strided_load %arg22[%c11_79, %c0_80] {strides = array<i32: 2, 1>} : memref<20x128xf32, #tpu.memory_space<vmem>>, vector<4x128xf32>
    %111 = tpu.concatenate %109, %110 in 0 : vector<4x128xf32>, vector<4x128xf32> -> vector<8x128xf32>
    %c2_81 = arith.constant 2 : index
    %c0_82 = arith.constant 0 : index
    %112 = tpu.strided_load %arg22[%c2_81, %c0_82] {strides = array<i32: 2, 1>} : memref<20x128xf32, #tpu.memory_space<vmem>>, vector<4x128xf32>
    %c12 = arith.constant 12 : index
    %c0_83 = arith.constant 0 : index
    %113 = tpu.strided_load %arg22[%c12, %c0_83] {strides = array<i32: 2, 1>} : memref<20x128xf32, #tpu.memory_space<vmem>>, vector<4x128xf32>
    %114 = tpu.concatenate %112, %113 in 0 : vector<4x128xf32>, vector<4x128xf32> -> vector<8x128xf32>
    %c3_84 = arith.constant 3 : index
    %c0_85 = arith.constant 0 : index
    %115 = tpu.strided_load %arg22[%c3_84, %c0_85] {strides = array<i32: 2, 1>} : memref<20x128xf32, #tpu.memory_space<vmem>>, vector<4x128xf32>
    %c13 = arith.constant 13 : index
    %c0_86 = arith.constant 0 : index
    %116 = tpu.strided_load %arg22[%c13, %c0_86] {strides = array<i32: 2, 1>} : memref<20x128xf32, #tpu.memory_space<vmem>>, vector<4x128xf32>
    %117 = tpu.concatenate %115, %116 in 0 : vector<4x128xf32>, vector<4x128xf32> -> vector<8x128xf32>
    %118 = tpu.concatenate %108, %111, %114, %117 in 1 : vector<8x128xf32>, vector<8x128xf32>, vector<8x128xf32>, vector<8x128xf32> -> vector<8x512xf32>
    %119 = arith.truncf %118 : vector<8x512xf32> to vector<8x512xbf16>
    %c0_87 = arith.constant 0 : index
    %c0_88 = arith.constant 0 : index
    %120 = vector.load %arg10[%c0_87, %c0_88] : memref<512x128xbf16, #tpu.memory_space<vmem>>, vector<512x128xbf16>
    %cst_89 = arith.constant dense<0.000000e+00> : vector<8x128xf32>
    %121 = tpu.matmul %119, %120, %cst_89 {dimension_numbers = #tpu.dot_dimension_numbers<[1], [0], [0], [1], [0, 0, 1, 1], [], []>} : vector<8x512xbf16>, vector<512x128xbf16>, vector<8x128xf32> -> vector<8x128xf32>
    %cst_90 = arith.constant 1.000000e+00 : f32
    %122 = vector.broadcast %cst_90 : f32 to vector<1x8xf32>
    %cst_91 = arith.constant dense<0.000000e+00> : vector<1x128xf32>
    %123 = tpu.matmul %122, %121, %cst_91 {dimension_numbers = #tpu.dot_dimension_numbers<[1], [0], [0], [1], [0, 0, 1, 1], [], []>} : vector<1x8xf32>, vector<8x128xf32>, vector<1x128xf32> -> vector<1x128xf32>
    %124 = arith.mulf %121, %121 : vector<8x128xf32>
    %cst_92 = arith.constant dense<0.000000e+00> : vector<1x128xf32>
    %125 = tpu.matmul %122, %124, %cst_92 {dimension_numbers = #tpu.dot_dimension_numbers<[1], [0], [0], [1], [0, 0, 1, 1], [], []>} : vector<1x8xf32>, vector<8x128xf32>, vector<1x128xf32> -> vector<1x128xf32>
    %c0_93 = arith.constant 0 : index
    %c0_94 = arith.constant 0 : index
    %126 = vector.load %arg13[%c0_93, %c0_94] : memref<128x128xf32, #tpu.memory_space<vmem>>, vector<128x128xf32>
    %cst_95 = arith.constant dense<0.000000e+00> : vector<1x128xf32>
    %127 = tpu.matmul %123, %126, %cst_95 {dimension_numbers = #tpu.dot_dimension_numbers<[1], [0], [0], [1], [0, 0, 1, 1], [], []>} : vector<1x128xf32>, vector<128x128xf32>, vector<1x128xf32> -> vector<1x128xf32>
    %cst_96 = arith.constant 3.125000e-02 : f32
    %128 = vector.broadcast %cst_96 : f32 to vector<1x128xf32>
    %129 = arith.mulf %127, %128 : vector<1x128xf32>
    %c0_97 = arith.constant 0 : index
    %c0_98 = arith.constant 0 : index
    %130 = vector.load %arg13[%c0_97, %c0_98] : memref<128x128xf32, #tpu.memory_space<vmem>>, vector<128x128xf32>
    %cst_99 = arith.constant dense<0.000000e+00> : vector<1x128xf32>
    %131 = tpu.matmul %125, %130, %cst_99 {dimension_numbers = #tpu.dot_dimension_numbers<[1], [0], [0], [1], [0, 0, 1, 1], [], []>} : vector<1x128xf32>, vector<128x128xf32>, vector<1x128xf32> -> vector<1x128xf32>
    %cst_100 = arith.constant 3.125000e-02 : f32
    %132 = vector.broadcast %cst_100 : f32 to vector<1x128xf32>
    %133 = arith.mulf %131, %132 : vector<1x128xf32>
    %134 = arith.mulf %129, %129 : vector<1x128xf32>
    %135 = arith.subf %133, %134 : vector<1x128xf32>
    %c0_101 = arith.constant 0 : index
    %c0_102 = arith.constant 0 : index
    %136 = vector.load %arg11[%c0_101, %c0_102] : memref<1x128xf32, #tpu.memory_space<vmem>>, vector<1x128xf32>
    %cst_103 = arith.constant 9.99999974E-6 : f32
    %137 = vector.broadcast %cst_103 : f32 to vector<1x128xf32>
    %138 = arith.addf %135, %137 : vector<1x128xf32>
    %139 = math.rsqrt %138 : vector<1x128xf32>
    %140 = arith.mulf %136, %139 : vector<1x128xf32>
    %c0_104 = arith.constant 0 : index
    %c0_105 = arith.constant 0 : index
    %141 = vector.load %arg12[%c0_104, %c0_105] : memref<1x128xf32, #tpu.memory_space<vmem>>, vector<1x128xf32>
    %142 = arith.mulf %129, %140 : vector<1x128xf32>
    %143 = arith.subf %141, %142 : vector<1x128xf32>
    %144 = vector.broadcast %140 : vector<1x128xf32> to vector<8x128xf32>
    %145 = arith.mulf %121, %144 : vector<8x128xf32>
    %146 = vector.broadcast %143 : vector<1x128xf32> to vector<8x128xf32>
    %147 = arith.addf %145, %146 : vector<8x128xf32>
    %cst_106 = arith.constant 0.000000e+00 : f32
    %148 = vector.broadcast %cst_106 : f32 to vector<8x128xf32>
    %149 = arith.cmpf oge, %147, %148 : vector<8x128xf32>
    %cst_107 = arith.constant 2.000000e-01 : f32
    %150 = vector.broadcast %cst_107 : f32 to vector<8x128xf32>
    %151 = arith.mulf %150, %147 : vector<8x128xf32>
    %152 = arith.select %149, %147, %151 : vector<8x128xi1>, vector<8x128xf32>
    %cst_108 = arith.constant 0.000000e+00 : f32
    %153 = vector.broadcast %cst_108 : f32 to vector<12x128xf32>
    %c0_109 = arith.constant 0 : index
    %c0_110 = arith.constant 0 : index
    %154 = vector.load %arg23[%c0_109, %c0_110] : memref<12x128xf32, #tpu.memory_space<vmem>>, vector<12x128xf32>
    tpu.vector_store %arg23[%c0_109, %c0_110], %153 {strides = array<i32>} : memref<12x128xf32, #tpu.memory_space<vmem>>, vector<12x128xf32>,
    %155 = vector.extract_strided_slice %152 {offsets = [0, 0], sizes = [4, 128], strides = [1, 1]} : vector<8x128xf32> to vector<4x128xf32>
    %c1_111 = arith.constant 1 : index
    %c0_112 = arith.constant 0 : index
    %156 = vector.load %arg23[%c1_111, %c0_112] : memref<12x128xf32, #tpu.memory_space<vmem>>, vector<4x128xf32>
    tpu.vector_store %arg23[%c1_111, %c0_112], %155 {strides = array<i32>} : memref<12x128xf32, #tpu.memory_space<vmem>>, vector<4x128xf32>,
    %157 = vector.extract_strided_slice %152 {offsets = [4, 0], sizes = [4, 128], strides = [1, 1]} : vector<8x128xf32> to vector<4x128xf32>
    %c7 = arith.constant 7 : index
    %c0_113 = arith.constant 0 : index
    %158 = vector.load %arg23[%c7, %c0_113] : memref<12x128xf32, #tpu.memory_space<vmem>>, vector<4x128xf32>
    tpu.vector_store %arg23[%c7, %c0_113], %157 {strides = array<i32>} : memref<12x128xf32, #tpu.memory_space<vmem>>, vector<4x128xf32>,
    %c0_114 = arith.constant 0 : index
    %c0_115 = arith.constant 0 : index
    %159 = tpu.strided_load %arg23[%c0_114, %c0_115] {strides = array<i32: 2, 1>} : memref<12x128xf32, #tpu.memory_space<vmem>>, vector<2x128xf32>
    %c6 = arith.constant 6 : index
    %c0_116 = arith.constant 0 : index
    %160 = tpu.strided_load %arg23[%c6, %c0_116] {strides = array<i32: 2, 1>} : memref<12x128xf32, #tpu.memory_space<vmem>>, vector<2x128xf32>
    %161 = tpu.concatenate %159, %160 in 0 : vector<2x128xf32>, vector<2x128xf32> -> vector<4x128xf32>
    %c1_117 = arith.constant 1 : index
    %c0_118 = arith.constant 0 : index
    %162 = tpu.strided_load %arg23[%c1_117, %c0_118] {strides = array<i32: 2, 1>} : memref<12x128xf32, #tpu.memory_space<vmem>>, vector<2x128xf32>
    %c7_119 = arith.constant 7 : index
    %c0_120 = arith.constant 0 : index
    %163 = tpu.strided_load %arg23[%c7_119, %c0_120] {strides = array<i32: 2, 1>} : memref<12x128xf32, #tpu.memory_space<vmem>>, vector<2x128xf32>
    %164 = tpu.concatenate %162, %163 in 0 : vector<2x128xf32>, vector<2x128xf32> -> vector<4x128xf32>
    %c2_121 = arith.constant 2 : index
    %c0_122 = arith.constant 0 : index
    %165 = tpu.strided_load %arg23[%c2_121, %c0_122] {strides = array<i32: 2, 1>} : memref<12x128xf32, #tpu.memory_space<vmem>>, vector<2x128xf32>
    %c8 = arith.constant 8 : index
    %c0_123 = arith.constant 0 : index
    %166 = tpu.strided_load %arg23[%c8, %c0_123] {strides = array<i32: 2, 1>} : memref<12x128xf32, #tpu.memory_space<vmem>>, vector<2x128xf32>
    %167 = tpu.concatenate %165, %166 in 0 : vector<2x128xf32>, vector<2x128xf32> -> vector<4x128xf32>
    %c3_124 = arith.constant 3 : index
    %c0_125 = arith.constant 0 : index
    %168 = tpu.strided_load %arg23[%c3_124, %c0_125] {strides = array<i32: 2, 1>} : memref<12x128xf32, #tpu.memory_space<vmem>>, vector<2x128xf32>
    %c9 = arith.constant 9 : index
    %c0_126 = arith.constant 0 : index
    %169 = tpu.strided_load %arg23[%c9, %c0_126] {strides = array<i32: 2, 1>} : memref<12x128xf32, #tpu.memory_space<vmem>>, vector<2x128xf32>
    %170 = tpu.concatenate %168, %169 in 0 : vector<2x128xf32>, vector<2x128xf32> -> vector<4x128xf32>
    %171 = tpu.concatenate %161, %164, %167, %170 in 1 : vector<4x128xf32>, vector<4x128xf32>, vector<4x128xf32>, vector<4x128xf32> -> vector<4x512xf32>
    %172 = arith.truncf %171 : vector<4x512xf32> to vector<4x512xbf16>
    %c0_127 = arith.constant 0 : index
    %c0_128 = arith.constant 0 : index
    %173 = vector.load %arg14[%c0_127, %c0_128] : memref<512x128xbf16, #tpu.memory_space<vmem>>, vector<512x128xbf16>
    %cst_129 = arith.constant dense<0.000000e+00> : vector<4x128xf32>
    %174 = tpu.matmul %172, %173, %cst_129 {dimension_numbers = #tpu.dot_dimension_numbers<[1], [0], [0], [1], [0, 0, 1, 1], [], []>} : vector<4x512xbf16>, vector<512x128xbf16>, vector<4x128xf32> -> vector<4x128xf32>
    %cst_130 = arith.constant 1.000000e+00 : f32
    %175 = vector.broadcast %cst_130 : f32 to vector<1x4xf32>
    %cst_131 = arith.constant dense<0.000000e+00> : vector<1x128xf32>
    %176 = tpu.matmul %175, %174, %cst_131 {dimension_numbers = #tpu.dot_dimension_numbers<[1], [0], [0], [1], [0, 0, 1, 1], [], []>} : vector<1x4xf32>, vector<4x128xf32>, vector<1x128xf32> -> vector<1x128xf32>
    %177 = arith.mulf %174, %174 : vector<4x128xf32>
    %cst_132 = arith.constant dense<0.000000e+00> : vector<1x128xf32>
    %178 = tpu.matmul %175, %177, %cst_132 {dimension_numbers = #tpu.dot_dimension_numbers<[1], [0], [0], [1], [0, 0, 1, 1], [], []>} : vector<1x4xf32>, vector<4x128xf32>, vector<1x128xf32> -> vector<1x128xf32>
    %c0_133 = arith.constant 0 : index
    %c0_134 = arith.constant 0 : index
    %179 = vector.load %arg17[%c0_133, %c0_134] : memref<128x128xf32, #tpu.memory_space<vmem>>, vector<128x128xf32>
    %cst_135 = arith.constant dense<0.000000e+00> : vector<1x128xf32>
    %180 = tpu.matmul %176, %179, %cst_135 {dimension_numbers = #tpu.dot_dimension_numbers<[1], [0], [0], [1], [0, 0, 1, 1], [], []>} : vector<1x128xf32>, vector<128x128xf32>, vector<1x128xf32> -> vector<1x128xf32>
    %cst_136 = arith.constant 1.250000e-01 : f32
    %181 = vector.broadcast %cst_136 : f32 to vector<1x128xf32>
    %182 = arith.mulf %180, %181 : vector<1x128xf32>
    %c0_137 = arith.constant 0 : index
    %c0_138 = arith.constant 0 : index
    %183 = vector.load %arg17[%c0_137, %c0_138] : memref<128x128xf32, #tpu.memory_space<vmem>>, vector<128x128xf32>
    %cst_139 = arith.constant dense<0.000000e+00> : vector<1x128xf32>
    %184 = tpu.matmul %178, %183, %cst_139 {dimension_numbers = #tpu.dot_dimension_numbers<[1], [0], [0], [1], [0, 0, 1, 1], [], []>} : vector<1x128xf32>, vector<128x128xf32>, vector<1x128xf32> -> vector<1x128xf32>
    %cst_140 = arith.constant 1.250000e-01 : f32
    %185 = vector.broadcast %cst_140 : f32 to vector<1x128xf32>
    %186 = arith.mulf %184, %185 : vector<1x128xf32>
    %187 = arith.mulf %182, %182 : vector<1x128xf32>
    %188 = arith.subf %186, %187 : vector<1x128xf32>
    %c0_141 = arith.constant 0 : index
    %c0_142 = arith.constant 0 : index
    %189 = vector.load %arg15[%c0_141, %c0_142] : memref<1x128xf32, #tpu.memory_space<vmem>>, vector<1x128xf32>
    %cst_143 = arith.constant 9.99999974E-6 : f32
    %190 = vector.broadcast %cst_143 : f32 to vector<1x128xf32>
    %191 = arith.addf %188, %190 : vector<1x128xf32>
    %192 = math.rsqrt %191 : vector<1x128xf32>
    %193 = arith.mulf %189, %192 : vector<1x128xf32>
    %c0_144 = arith.constant 0 : index
    %c0_145 = arith.constant 0 : index
    %194 = vector.load %arg16[%c0_144, %c0_145] : memref<1x128xf32, #tpu.memory_space<vmem>>, vector<1x128xf32>
    %195 = arith.mulf %182, %193 : vector<1x128xf32>
    %196 = arith.subf %194, %195 : vector<1x128xf32>
    %197 = vector.broadcast %193 : vector<1x128xf32> to vector<4x128xf32>
    %198 = arith.mulf %174, %197 : vector<4x128xf32>
    %199 = vector.broadcast %196 : vector<1x128xf32> to vector<4x128xf32>
    %200 = arith.addf %198, %199 : vector<4x128xf32>
    %cst_146 = arith.constant 0.000000e+00 : f32
    %201 = vector.broadcast %cst_146 : f32 to vector<4x128xf32>
    %202 = arith.cmpf oge, %200, %201 : vector<4x128xf32>
    %cst_147 = arith.constant 2.000000e-01 : f32
    %203 = vector.broadcast %cst_147 : f32 to vector<4x128xf32>
    %204 = arith.mulf %203, %200 : vector<4x128xf32>
    %205 = arith.select %202, %200, %204 : vector<4x128xi1>, vector<4x128xf32>
    %c0_148 = arith.constant 0 : index
    %c0_149 = arith.constant 0 : index
    %206 = vector.load %arg18[%c0_148, %c0_149] : memref<4x128xf32, #tpu.memory_space<vmem>>, vector<4x128xf32>
    %207 = arith.mulf %205, %206 : vector<4x128xf32>
    %c0_150 = arith.constant 0 : index
    %c0_151 = arith.constant 0 : index
    %208 = vector.load %arg19[%c0_150, %c0_151] : memref<2x4xf32, #tpu.memory_space<vmem>>, vector<2x4xf32>
    %cst_152 = arith.constant dense<0.000000e+00> : vector<2x128xf32>
    %209 = tpu.matmul %208, %207, %cst_152 {dimension_numbers = #tpu.dot_dimension_numbers<[1], [0], [0], [1], [0, 0, 1, 1], [], []>} : vector<2x4xf32>, vector<4x128xf32>, vector<2x128xf32> -> vector<2x128xf32>
    %cst_153 = arith.constant dense<0.000000e+00> : vector<2xf32>
    %210 = vector.multi_reduction <add>, %209, %cst_153 [1] : vector<2x128xf32> to vector<2xf32>
    %211 = vector.shape_cast %210 : vector<2xf32> to vector<2x1xf32>
    %c0_154 = arith.constant 0 : index
    %c0_155 = arith.constant 0 : index
    %212 = vector.load %arg20[%c0_154, %c0_155] : memref<2x1xf32, #tpu.memory_space<vmem>>, vector<2x1xf32>
    tpu.vector_store %arg20[%c0_154, %c0_155], %211 {strides = array<i32>} : memref<2x1xf32, #tpu.memory_space<vmem>>, vector<2x1xf32>,
    return
  }
  func.func @transform_0(%arg0: i32) -> (i32, i32) {
    %c0_i32 = arith.constant 0 : i32
    %c0_i32_0 = arith.constant 0 : i32
    %c0_i32_1 = arith.constant 0 : i32
    return %c0_i32, %c0_i32_0 : i32, i32
  }
  func.func @transform_1(%arg0: i32) -> (i32, i32) {
    %c0_i32 = arith.constant 0 : i32
    %c0_i32_0 = arith.constant 0 : i32
    %c0_i32_1 = arith.constant 0 : i32
    return %c0_i32, %c0_i32_0 : i32, i32
  }
  func.func @transform_2(%arg0: i32) -> (i32, i32) {
    %c0_i32 = arith.constant 0 : i32
    %c0_i32_0 = arith.constant 0 : i32
    %c0_i32_1 = arith.constant 0 : i32
    return %c0_i32, %c0_i32_0 : i32, i32
  }
  func.func @transform_3(%arg0: i32) -> (i32, i32) {
    %c0_i32 = arith.constant 0 : i32
    %c0_i32_0 = arith.constant 0 : i32
    %c0_i32_1 = arith.constant 0 : i32
    return %c0_i32, %c0_i32_0 : i32, i32
  }
  func.func @transform_4(%arg0: i32) -> (i32, i32) {
    %c0_i32 = arith.constant 0 : i32
    %c0_i32_0 = arith.constant 0 : i32
    %c0_i32_1 = arith.constant 0 : i32
    return %c0_i32, %c0_i32_0 : i32, i32
  }
  func.func @transform_5(%arg0: i32) -> (i32, i32) {
    %c0_i32 = arith.constant 0 : i32
    %c0_i32_0 = arith.constant 0 : i32
    %c0_i32_1 = arith.constant 0 : i32
    return %c0_i32, %c0_i32_0 : i32, i32
  }
  func.func @transform_6(%arg0: i32) -> (i32, i32) {
    %c0_i32 = arith.constant 0 : i32
    %c0_i32_0 = arith.constant 0 : i32
    %c0_i32_1 = arith.constant 0 : i32
    return %c0_i32, %c0_i32_0 : i32, i32
  }
  func.func @transform_7(%arg0: i32) -> (i32, i32) {
    %c0_i32 = arith.constant 0 : i32
    %c0_i32_0 = arith.constant 0 : i32
    %c0_i32_1 = arith.constant 0 : i32
    return %c0_i32, %c0_i32_0 : i32, i32
  }
  func.func @transform_8(%arg0: i32) -> (i32, i32) {
    %c0_i32 = arith.constant 0 : i32
    %c0_i32_0 = arith.constant 0 : i32
    %c0_i32_1 = arith.constant 0 : i32
    return %c0_i32, %c0_i32_0 : i32, i32
  }
  func.func @transform_9(%arg0: i32) -> (i32, i32) {
    %c0_i32 = arith.constant 0 : i32
    %c0_i32_0 = arith.constant 0 : i32
    %c0_i32_1 = arith.constant 0 : i32
    return %c0_i32, %c0_i32_0 : i32, i32
  }
  func.func @transform_10(%arg0: i32) -> (i32, i32) {
    %c0_i32 = arith.constant 0 : i32
    %c0_i32_0 = arith.constant 0 : i32
    %c0_i32_1 = arith.constant 0 : i32
    return %c0_i32, %c0_i32_0 : i32, i32
  }
  func.func @transform_11(%arg0: i32) -> (i32, i32) {
    %c0_i32 = arith.constant 0 : i32
    %c0_i32_0 = arith.constant 0 : i32
    %c0_i32_1 = arith.constant 0 : i32
    return %c0_i32, %c0_i32_0 : i32, i32
  }
  func.func @transform_12(%arg0: i32) -> (i32, i32) {
    %c0_i32 = arith.constant 0 : i32
    %c0_i32_0 = arith.constant 0 : i32
    %c0_i32_1 = arith.constant 0 : i32
    return %c0_i32, %c0_i32_0 : i32, i32
  }
  func.func @transform_13(%arg0: i32) -> (i32, i32) {
    %c0_i32 = arith.constant 0 : i32
    %c0_i32_0 = arith.constant 0 : i32
    %c0_i32_1 = arith.constant 0 : i32
    return %c0_i32, %c0_i32_0 : i32, i32
  }
  func.func @transform_14(%arg0: i32) -> (i32, i32) {
    %c0_i32 = arith.constant 0 : i32
    %c0_i32_0 = arith.constant 0 : i32
    %c0_i32_1 = arith.constant 0 : i32
    return %c0_i32, %c0_i32_0 : i32, i32
  }
  func.func @transform_15(%arg0: i32) -> (i32, i32) {
    %c0_i32 = arith.constant 0 : i32
    %c0_i32_0 = arith.constant 0 : i32
    %c0_i32_1 = arith.constant 0 : i32
    return %c0_i32, %c0_i32_0 : i32, i32
  }
  func.func @transform_16(%arg0: i32) -> (i32, i32) {
    %c0_i32 = arith.constant 0 : i32
    %c0_i32_0 = arith.constant 0 : i32
    %c0_i32_1 = arith.constant 0 : i32
    return %c0_i32, %c0_i32_0 : i32, i32
  }
  func.func @transform_17(%arg0: i32) -> (i32, i32) {
    %c0_i32 = arith.constant 0 : i32
    %c0_i32_0 = arith.constant 0 : i32
    %c0_i32_1 = arith.constant 0 : i32
    return %c0_i32, %c0_i32_0 : i32, i32
  }
  func.func @transform_18(%arg0: i32) -> (i32, i32) {
    %c0_i32 = arith.constant 0 : i32
    %c0_i32_0 = arith.constant 0 : i32
    %c0_i32_1 = arith.constant 0 : i32
    return %c0_i32, %c0_i32_0 : i32, i32
  }
  func.func @transform_19(%arg0: i32) -> (i32, i32) {
    %c0_i32 = arith.constant 0 : i32
    %c0_i32_0 = arith.constant 0 : i32
    %c0_i32_1 = arith.constant 0 : i32
    return %c0_i32, %c0_i32_0 : i32, i32
  }
}

</mosaic_0001>

<llo_original>
// kernel: cifar_disc_forward.1
$region0: #{cifar_disc_forward.1}
  #allocation0 [shape = 'u32[]', space=smem, size = 0x4, offset = 0x4, fixed_abs, tag = 'smem constant byte address 0x4 - core index']
  #allocation1 [shape = 'u32[72,128]{1,0:T(1,128)}', space=vmem, size = 0x9000, scoped, tag = 'internal scratch']
  #allocation2 [shape = 'f32[36,128]{1,0:T(8,128)}', space=vmem, size = 0x5000, scoped, tag = 'scratch operand']
  #allocation3 [shape = 'f32[20,128]{1,0:T(8,128)}', space=vmem, size = 0x3000, scoped, tag = 'scratch operand']
  #allocation4 [shape = 'f32[12,128]{1,0:T(8,128)}', space=vmem, size = 0x2000, scoped, tag = 'scratch operand']
  %s0 = inlined_call_operand.vmem [shape: f32[68,128], index: 0, kind: input, shape index: {}]
  %s1 = inlined_call_operand.vmem [shape: bf16[512,128], index: 1, kind: input, shape index: {}]
  %s2 = inlined_call_operand.vmem [shape: f32[1,128], index: 2, kind: input, shape index: {}]
  %s3 = inlined_call_operand.vmem [shape: f32[1,128], index: 3, kind: input, shape index: {}]
  %s4 = inlined_call_operand.vmem [shape: f32[128,128], index: 4, kind: input, shape index: {}]
  %s5 = inlined_call_operand.vmem [shape: bf16[512,128], index: 5, kind: input, shape index: {}]
  %s6 = inlined_call_operand.vmem [shape: f32[1,128], index: 6, kind: input, shape index: {}]
  %s7 = inlined_call_operand.vmem [shape: f32[1,128], index: 7, kind: input, shape index: {}]
  %s8 = inlined_call_operand.hbm [shape: f32[128,128], index: 8, kind: input, shape index: {}]
  %s9 = inlined_call_operand.vmem [shape: bf16[512,128], index: 9, kind: input, shape index: {}]
  %s10 = inlined_call_operand.vmem [shape: f32[1,128], index: 10, kind: input, shape index: {}]
  %s11 = inlined_call_operand.vmem [shape: f32[1,128], index: 11, kind: input, shape index: {}]
  %s12 = inlined_call_operand.hbm [shape: f32[128,128], index: 12, kind: input, shape index: {}]
  %s13 = inlined_call_operand.hbm [shape: bf16[512,128], index: 13, kind: input, shape index: {}]
  %s14 = inlined_call_operand.vmem [shape: f32[1,128], index: 14, kind: input, shape index: {}]
  %s15 = inlined_call_operand.vmem [shape: f32[1,128], index: 15, kind: input, shape index: {}]
  %s16 = inlined_call_operand.hbm [shape: f32[128,128], index: 16, kind: input, shape index: {}]
  %s17 = inlined_call_operand.vmem [shape: f32[4,128], index: 17, kind: input, shape index: {}]
  %s18 = inlined_call_operand.vmem [shape: f32[2,4], index: 18, kind: input, shape index: {}]
  %s19 = inlined_call_operand.vmem [shape: f32[2,1], index: 19, kind: output, shape index: {}]
  %s20 = sld [smem:[#allocation0]]
  $region102: #{cifar_disc_forward.1} parent=0
    _
  %s22 = ssub.s32 1, %s20
  %s23 = scalar_select 0, %s22, %s20
  $region1: #{cifar_disc_forward.1} parent=0
    #allocation5 [shape = 'u8[65536]{0}', space=vmem, size = 0x10000, scoped, tag = 'input window, operand 8, single buffered']
    #allocation6 [shape = 's32[1]{0}', space=sflag, size = 0x4, scoped, tag = 'scoped memory for cifar_disc_forward.1']
    #allocation7 [shape = 'u8[65536]{0}', space=vmem, size = 0x10000, scoped, tag = 'input window, operand 12, single buffered']
    #allocation8 [shape = 's32[1]{0}', space=sflag, size = 0x4, scoped, tag = 'scoped memory for cifar_disc_forward.1']
    #allocation9 [shape = 'u8[131072]{0}', space=vmem, size = 0x20000, scoped, tag = 'input window, operand 13, single buffered']
    #allocation10 [shape = 'u8[65536]{0}', space=vmem, size = 0x10000, scoped, tag = 'input window, operand 16, single buffered']
    #allocation11 [shape = 's32[1]{0}', space=sflag, size = 0x4, scoped, tag = 'scoped memory for cifar_disc_forward.1']
    %24 = vsyncpa [#allocation6], 0
    %25 = vsyncpa [#allocation8], 0
    %26 = vsyncpa [#allocation11], 0
    // Predicated region
    $region2: #{cifar_disc_forward.1} parent=1 // pred_check
      _
    $region3: #{cifar_disc_forward.1} parent=1 // pred_check_branch
      %28 = sbr.rel (0) target = $region5
    $region4: #{cifar_disc_forward.1} parent=1 // pred_region
      _
    $region5: #{cifar_disc_forward.1} parent=1 // pred_fallthru
      _
    // Predicated region
    $region6: #{cifar_disc_forward.1} parent=1 // pred_check
      _
    $region7: #{cifar_disc_forward.1} parent=1 // pred_check_branch
      %30 = sbr.rel (0) target = $region9
    $region8: #{cifar_disc_forward.1} parent=1 // pred_region
      _
    $region9: #{cifar_disc_forward.1} parent=1 // pred_fallthru
      _
    // Predicated region
    $region10: #{cifar_disc_forward.1} parent=1 // pred_check
      _
    $region11: #{cifar_disc_forward.1} parent=1 // pred_check_branch
      %32 = sbr.rel (0) target = $region13
    $region12: #{cifar_disc_forward.1} parent=1 // pred_region
      _
    $region13: #{cifar_disc_forward.1} parent=1 // pred_fallthru
      _
    // Predicated region
    $region14: #{cifar_disc_forward.1} parent=1 // pred_check
      _
    $region15: #{cifar_disc_forward.1} parent=1 // pred_check_branch
      %34 = sbr.rel (0) target = $region17
    $region16: #{cifar_disc_forward.1} parent=1 // pred_region
      _
    $region17: #{cifar_disc_forward.1} parent=1 // pred_fallthru
      _
    // Predicated region
    $region18: #{cifar_disc_forward.1} parent=1 // pred_check
      _
    $region19: #{cifar_disc_forward.1} parent=1 // pred_check_branch
      %36 = sbr.rel (0) target = $region21
    $region20: #{cifar_disc_forward.1} parent=1 // pred_region
      _
    $region21: #{cifar_disc_forward.1} parent=1 // pred_fallthru
      _
    // Predicated region
    $region22: #{cifar_disc_forward.1} parent=1 // pred_check
      _
    $region23: #{cifar_disc_forward.1} parent=1 // pred_check_branch
      %38 = sbr.rel (0) target = $region25
    $region24: #{cifar_disc_forward.1} parent=1 // pred_region
      _
    $region25: #{cifar_disc_forward.1} parent=1 // pred_fallthru
      _
    // Predicated region
    $region26: #{cifar_disc_forward.1} parent=1 // pred_check
      _
    $region27: #{cifar_disc_forward.1} parent=1 // pred_check_branch
      %40 = sbr.rel (0) target = $region29
    $region28: #{cifar_disc_forward.1} parent=1 // pred_region
      _
    $region29: #{cifar_disc_forward.1} parent=1 // pred_fallthru
      _
    // Predicated region
    $region30: #{cifar_disc_forward.1} parent=1 // pred_check
      _
    $region31: #{cifar_disc_forward.1} parent=1 // pred_check_branch
      %42 = sbr.rel (0) target = $region33
    $region32: #{cifar_disc_forward.1} parent=1 // pred_region
      _
    $region33: #{cifar_disc_forward.1} parent=1 // pred_fallthru
      _
    // Predicated region
    $region34: #{cifar_disc_forward.1} parent=1 // pred_check
      _
    $region35: #{cifar_disc_forward.1} parent=1 // pred_check_branch
      %44 = sbr.rel (0) target = $region37
    $region36: #{cifar_disc_forward.1} parent=1 // pred_region
      %46 = vsyncadd [#allocation6], 0
      %s47 = sshll.u32 %s8, 4
      %s48 = int_to_ptr.hbm [resolvable:$true] %s47
      %s49 = sshll.u32 [#allocation5], 4
      %s50 = int_to_ptr.vmem [resolvable:$true] %s49
      %55 = dma.hbm_to_vmem [thread:$0]  %s48, 2048, %s50, [#allocation6], 128, 128, 8
    $region37: #{cifar_disc_forward.1} parent=1 // pred_fallthru
      _
    // Predicated region
    $region38: #{cifar_disc_forward.1} parent=1 // pred_check
      _
    $region39: #{cifar_disc_forward.1} parent=1 // pred_check_branch
      %57 = sbr.rel (0) target = $region41
    $region40: #{cifar_disc_forward.1} parent=1 // pred_region
      _
    $region41: #{cifar_disc_forward.1} parent=1 // pred_fallthru
      _
    // Predicated region
    $region42: #{cifar_disc_forward.1} parent=1 // pred_check
      _
    $region43: #{cifar_disc_forward.1} parent=1 // pred_check_branch
      %59 = sbr.rel (0) target = $region45
    $region44: #{cifar_disc_forward.1} parent=1 // pred_region
      _
    $region45: #{cifar_disc_forward.1} parent=1 // pred_fallthru
      _
    // Predicated region
    $region46: #{cifar_disc_forward.1} parent=1 // pred_check
      _
    $region47: #{cifar_disc_forward.1} parent=1 // pred_check_branch
      %61 = sbr.rel (0) target = $region49
    $region48: #{cifar_disc_forward.1} parent=1 // pred_region
      _
    $region49: #{cifar_disc_forward.1} parent=1 // pred_fallthru
      _
    // Predicated region
    $region50: #{cifar_disc_forward.1} parent=1 // pred_check
      _
    $region51: #{cifar_disc_forward.1} parent=1 // pred_check_branch
      %63 = sbr.rel (0) target = $region53
    $region52: #{cifar_disc_forward.1} parent=1 // pred_region
      %65 = vsyncadd [#allocation8], 0
      %s66 = sshll.u32 %s12, 4
      %s67 = int_to_ptr.hbm [resolvable:$true] %s66
      %s68 = sshll.u32 [#allocation7], 4
      %s69 = int_to_ptr.vmem [resolvable:$true] %s68
      %74 = dma.hbm_to_vmem [thread:$0]  %s67, 2048, %s69, [#allocation8], 128, 128, 8
    $region53: #{cifar_disc_forward.1} parent=1 // pred_fallthru
      _
    // Predicated region
    $region54: #{cifar_disc_forward.1} parent=1 // pred_check
      _
    $region55: #{cifar_disc_forward.1} parent=1 // pred_check_branch
      %76 = sbr.rel (0) target = $region57
    $region56: #{cifar_disc_forward.1} parent=1 // pred_region
      %78 = vsyncadd [#allocation8], 0
      %s79 = sshll.u32 %s13, 4
      %s80 = int_to_ptr.hbm [resolvable:$true] %s79
      %s81 = sshll.u32 [#allocation9], 4
      %s82 = int_to_ptr.vmem [resolvable:$true] %s81
      %87 = dma.hbm_to_vmem [thread:$0]  %s80, 4096, %s82, [#allocation8], 64, 64, 4
    $region57: #{cifar_disc_forward.1} parent=1 // pred_fallthru
      _
    // Predicated region
    $region58: #{cifar_disc_forward.1} parent=1 // pred_check
      _
    $region59: #{cifar_disc_forward.1} parent=1 // pred_check_branch
      %89 = sbr.rel (0) target = $region61
    $region60: #{cifar_disc_forward.1} parent=1 // pred_region
      _
    $region61: #{cifar_disc_forward.1} parent=1 // pred_fallthru
      _
    // Predicated region
    $region62: #{cifar_disc_forward.1} parent=1 // pred_check
      _
    $region63: #{cifar_disc_forward.1} parent=1 // pred_check_branch
      %91 = sbr.rel (0) target = $region65
    $region64: #{cifar_disc_forward.1} parent=1 // pred_region
      _
    $region65: #{cifar_disc_forward.1} parent=1 // pred_fallthru
      _
    // Predicated region
    $region66: #{cifar_disc_forward.1} parent=1 // pred_check
      _
    $region67: #{cifar_disc_forward.1} parent=1 // pred_check_branch
      %93 = sbr.rel (0) target = $region69
    $region68: #{cifar_disc_forward.1} parent=1 // pred_region
      %95 = vsyncadd [#allocation11], 0
      %s96 = sshll.u32 %s16, 4
      %s97 = int_to_ptr.hbm [resolvable:$true] %s96
      %s98 = sshll.u32 [#allocation10], 4
      %s99 = int_to_ptr.vmem [resolvable:$true] %s98
      %104 = dma.hbm_to_vmem [thread:$0]  %s97, 2048, %s99, [#allocation11], 128, 128, 8
    $region69: #{cifar_disc_forward.1} parent=1 // pred_fallthru
      _
    // Predicated region
    $region70: #{cifar_disc_forward.1} parent=1 // pred_check
      _
    $region71: #{cifar_disc_forward.1} parent=1 // pred_check_branch
      %106 = sbr.rel (0) target = $region73
    $region72: #{cifar_disc_forward.1} parent=1 // pred_region
      _
    $region73: #{cifar_disc_forward.1} parent=1 // pred_fallthru
      _
    // Predicated region
    $region74: #{cifar_disc_forward.1} parent=1 // pred_check
      _
    $region75: #{cifar_disc_forward.1} parent=1 // pred_check_branch
      %108 = sbr.rel (0) target = $region77
    $region76: #{cifar_disc_forward.1} parent=1 // pred_region
      _
    $region77: #{cifar_disc_forward.1} parent=1 // pred_fallthru
      _
    // Predicated region
    $region78: #{cifar_disc_forward.1} parent=1 // pred_check
      _
    $region79: #{cifar_disc_forward.1} parent=1 // pred_check_branch
      %110 = sbr.rel (0) target = $region81
    $region80: #{cifar_disc_forward.1} parent=1 // pred_region
      %112 = dma.done [#allocation6], 2048
    $region81: #{cifar_disc_forward.1} parent=1 // pred_fallthru
      _
    // Predicated region
    $region82: #{cifar_disc_forward.1} parent=1 // pred_check
      _
    $region83: #{cifar_disc_forward.1} parent=1 // pred_check_branch
      %114 = sbr.rel (0) target = $region85
    $region84: #{cifar_disc_forward.1} parent=1 // pred_region
      %116 = dma.done [#allocation8], 2048
    $region85: #{cifar_disc_forward.1} parent=1 // pred_fallthru
      _
    // Predicated region
    $region86: #{cifar_disc_forward.1} parent=1 // pred_check
      _
    $region87: #{cifar_disc_forward.1} parent=1 // pred_check_branch
      %118 = sbr.rel (0) target = $region89
    $region88: #{cifar_disc_forward.1} parent=1 // pred_region
      %120 = dma.done [#allocation8], 4096
    $region89: #{cifar_disc_forward.1} parent=1 // pred_fallthru
      _
    // Predicated region
    $region90: #{cifar_disc_forward.1} parent=1 // pred_check
      _
    $region91: #{cifar_disc_forward.1} parent=1 // pred_check_branch
      %122 = sbr.rel (0) target = $region93
    $region92: #{cifar_disc_forward.1} parent=1 // pred_region
      %124 = dma.done [#allocation11], 2048
    $region93: #{cifar_disc_forward.1} parent=1 // pred_fallthru
      _
    %v125 = vld [vmem:[%s0] ss:$2 sm:$0xff]
    %s126 = scalar_lea.vmem %s0, 16
    %v127 = vld [vmem:[%s126] ss:$2 sm:$0xff]
    %s128 = scalar_lea.vmem %s0, 34
    %v129 = vld [vmem:[%s128] ss:$2 sm:$0xff]
    %s130 = scalar_lea.vmem %s0, 50
    %v131 = vld [vmem:[%s130] ss:$2 sm:$0xff]
    %s132 = scalar_lea.vmem %s0, 1
    %v133 = vld [vmem:[%s132] ss:$2 sm:$0xff]
    %s134 = scalar_lea.vmem %s0, 17
    %v135 = vld [vmem:[%s134] ss:$2 sm:$0xff]
    %s136 = scalar_lea.vmem %s0, 35
    %v137 = vld [vmem:[%s136] ss:$2 sm:$0xff]
    %s138 = scalar_lea.vmem %s0, 51
    %v139 = vld [vmem:[%s138] ss:$2 sm:$0xff]
    %s140 = scalar_lea.vmem %s0, 2
    %v141 = vld [vmem:[%s140] ss:$2 sm:$0xff]
    %s142 = scalar_lea.vmem %s0, 18
    %v143 = vld [vmem:[%s142] ss:$2 sm:$0xff]
    %s144 = scalar_lea.vmem %s0, 36
    %v145 = vld [vmem:[%s144] ss:$2 sm:$0xff]
    %s146 = scalar_lea.vmem %s0, 52
    %v147 = vld [vmem:[%s146] ss:$2 sm:$0xff]
    %s148 = scalar_lea.vmem %s0, 3
    %v149 = vld [vmem:[%s148] ss:$2 sm:$0xff]
    %s150 = scalar_lea.vmem %s0, 19
    %v151 = vld [vmem:[%s150] ss:$2 sm:$0xff]
    %s152 = scalar_lea.vmem %s0, 37
    %v153 = vld [vmem:[%s152] ss:$2 sm:$0xff]
    %s154 = scalar_lea.vmem %s0, 53
    %v155 = vld [vmem:[%s154] ss:$2 sm:$0xff]
    %v156 = vpack.c.bf16 %v127, %v125
    %v157 = vpack.c.bf16 %v135, %v133
    %v158 = vpack.c.bf16 %v143, %v141
    %v159 = vpack.c.bf16 %v151, %v149
    %v160 = vpack.c.bf16 %v131, %v129
    %v161 = vpack.c.bf16 %v139, %v137
    %v162 = vpack.c.bf16 %v147, %v145
    %v163 = vpack.c.bf16 %v155, %v153
    %v164 = vld [vmem:[%s1] sm:$0xf]
    %v165 = vld [vmem:[%s1 + $0x4] sm:$0xf]
    %v166 = vld [vmem:[%s1 + $0x8] sm:$0xf]
    %v167 = vld [vmem:[%s1 + $0xc] sm:$0xf]
    %v168 = vld [vmem:[%s1 + $0x10] sm:$0xf]
    %v169 = vld [vmem:[%s1 + $0x14] sm:$0xf]
    %v170 = vld [vmem:[%s1 + $0x18] sm:$0xf]
    %v171 = vld [vmem:[%s1 + $0x1c] sm:$0xf]
    %v172 = vld [vmem:[%s1 + $0x20] sm:$0xf]
    %v173 = vld [vmem:[%s1 + $0x24] sm:$0xf]
    %v174 = vld [vmem:[%s1 + $0x28] sm:$0xf]
    %v175 = vld [vmem:[%s1 + $0x2c] sm:$0xf]
    %v176 = vld [vmem:[%s1 + $0x30] sm:$0xf]
    %v177 = vld [vmem:[%s1 + $0x34] sm:$0xf]
    %v178 = vld [vmem:[%s1 + $0x38] sm:$0xf]
    %v179 = vld [vmem:[%s1 + $0x3c] sm:$0xf]
    %v180 = vld [vmem:[%s1 + $0x40] sm:$0xf]
    %v181 = vld [vmem:[%s1 + $0x44] sm:$0xf]
    %v182 = vld [vmem:[%s1 + $0x48] sm:$0xf]
    %v183 = vld [vmem:[%s1 + $0x4c] sm:$0xf]
    %v184 = vld [vmem:[%s1 + $0x50] sm:$0xf]
    %v185 = vld [vmem:[%s1 + $0x54] sm:$0xf]
    %v186 = vld [vmem:[%s1 + $0x58] sm:$0xf]
    %v187 = vld [vmem:[%s1 + $0x5c] sm:$0xf]
    %v188 = vld [vmem:[%s1 + $0x60] sm:$0xf]
    %v189 = vld [vmem:[%s1 + $0x64] sm:$0xf]
    %v190 = vld [vmem:[%s1 + $0x68] sm:$0xf]
    %v191 = vld [vmem:[%s1 + $0x6c] sm:$0xf]
    %v192 = vld [vmem:[%s1 + $0x70] sm:$0xf]
    %v193 = vld [vmem:[%s1 + $0x74] sm:$0xf]
    %v194 = vld [vmem:[%s1 + $0x78] sm:$0xf]
    %v195 = vld [vmem:[%s1 + $0x7c] sm:$0xf]
    %v196 = vld [vmem:[%s1 + $0x80] sm:$0xf]
    %v197 = vld [vmem:[%s1 + $0x84] sm:$0xf]
    %v198 = vld [vmem:[%s1 + $0x88] sm:$0xf]
    %v199 = vld [vmem:[%s1 + $0x8c] sm:$0xf]
    %v200 = vld [vmem:[%s1 + $0x90] sm:$0xf]
    %v201 = vld [vmem:[%s1 + $0x94] sm:$0xf]
    %v202 = vld [vmem:[%s1 + $0x98] sm:$0xf]
    %v203 = vld [vmem:[%s1 + $0x9c] sm:$0xf]
    %v204 = vld [vmem:[%s1 + $0xa0] sm:$0xf]
    %v205 = vld [vmem:[%s1 + $0xa4] sm:$0xf]
    %v206 = vld [vmem:[%s1 + $0xa8] sm:$0xf]
    %v207 = vld [vmem:[%s1 + $0xac] sm:$0xf]
    %v208 = vld [vmem:[%s1 + $0xb0] sm:$0xf]
    %v209 = vld [vmem:[%s1 + $0xb4] sm:$0xf]
    %v210 = vld [vmem:[%s1 + $0xb8] sm:$0xf]
    %v211 = vld [vmem:[%s1 + $0xbc] sm:$0xf]
    %v212 = vld [vmem:[%s1 + $0xc0] sm:$0xf]
    %v213 = vld [vmem:[%s1 + $0xc4] sm:$0xf]
    %v214 = vld [vmem:[%s1 + $0xc8] sm:$0xf]
    %v215 = vld [vmem:[%s1 + $0xcc] sm:$0xf]
    %v216 = vld [vmem:[%s1 + $0xd0] sm:$0xf]
    %v217 = vld [vmem:[%s1 + $0xd4] sm:$0xf]
    %v218 = vld [vmem:[%s1 + $0xd8] sm:$0xf]
    %v219 = vld [vmem:[%s1 + $0xdc] sm:$0xf]
    %v220 = vld [vmem:[%s1 + $0xe0] sm:$0xf]
    %v221 = vld [vmem:[%s1 + $0xe4] sm:$0xf]
    %v222 = vld [vmem:[%s1 + $0xe8] sm:$0xf]
    %v223 = vld [vmem:[%s1 + $0xec] sm:$0xf]
    %v224 = vld [vmem:[%s1 + $0xf0] sm:$0xf]
    %v225 = vld [vmem:[%s1 + $0xf4] sm:$0xf]
    %v226 = vld [vmem:[%s1 + $0xf8] sm:$0xf]
    %v227 = vld [vmem:[%s1 + $0xfc] sm:$0xf]
    %v292 = vunpack.c.l.b16 %v164
    %v293 = vunpack.c.l.b16 %v165
    %v294 = vunpack.c.l.b16 %v166
    %v295 = vunpack.c.l.b16 %v167
    %v296 = vunpack.c.l.b16 %v168
    %v297 = vunpack.c.l.b16 %v169
    %v298 = vunpack.c.l.b16 %v170
    %v299 = vunpack.c.l.b16 %v171
    %v300 = vunpack.c.l.b16 %v172
    %v301 = vunpack.c.l.b16 %v173
    %v302 = vunpack.c.l.b16 %v174
    %v303 = vunpack.c.l.b16 %v175
    %v304 = vunpack.c.l.b16 %v176
    %v305 = vunpack.c.l.b16 %v177
    %v306 = vunpack.c.l.b16 %v178
    %v307 = vunpack.c.l.b16 %v179
    %v308 = vunpack.c.l.b16 %v180
    %v309 = vunpack.c.l.b16 %v181
    %v310 = vunpack.c.l.b16 %v182
    %v311 = vunpack.c.l.b16 %v183
    %v312 = vunpack.c.l.b16 %v184
    %v313 = vunpack.c.l.b16 %v185
    %v314 = vunpack.c.l.b16 %v186
    %v315 = vunpack.c.l.b16 %v187
    %v316 = vunpack.c.l.b16 %v188
    %v317 = vunpack.c.l.b16 %v189
    %v318 = vunpack.c.l.b16 %v190
    %v319 = vunpack.c.l.b16 %v191
    %v320 = vunpack.c.l.b16 %v192
    %v321 = vunpack.c.l.b16 %v193
    %v322 = vunpack.c.l.b16 %v194
    %v323 = vunpack.c.l.b16 %v195
    %v324 = vunpack.c.l.b16 %v196
    %v325 = vunpack.c.l.b16 %v197
    %v326 = vunpack.c.l.b16 %v198
    %v327 = vunpack.c.l.b16 %v199
    %v328 = vunpack.c.l.b16 %v200
    %v329 = vunpack.c.l.b16 %v201
    %v330 = vunpack.c.l.b16 %v202
    %v331 = vunpack.c.l.b16 %v203
    %v332 = vunpack.c.l.b16 %v204
    %v333 = vunpack.c.l.b16 %v205
    %v334 = vunpack.c.l.b16 %v206
    %v335 = vunpack.c.l.b16 %v207
    %v336 = vunpack.c.l.b16 %v208
    %v337 = vunpack.c.l.b16 %v209
    %v338 = vunpack.c.l.b16 %v210
    %v339 = vunpack.c.l.b16 %v211
    %v340 = vunpack.c.l.b16 %v212
    %v341 = vunpack.c.l.b16 %v213
    %v342 = vunpack.c.l.b16 %v214
    %v343 = vunpack.c.l.b16 %v215
    %v344 = vunpack.c.l.b16 %v216
    %v345 = vunpack.c.l.b16 %v217
    %v346 = vunpack.c.l.b16 %v218
    %v347 = vunpack.c.l.b16 %v219
    %v348 = vunpack.c.l.b16 %v220
    %v349 = vunpack.c.l.b16 %v221
    %v350 = vunpack.c.l.b16 %v222
    %v351 = vunpack.c.l.b16 %v223
    %v352 = vunpack.c.l.b16 %v224
    %v353 = vunpack.c.l.b16 %v225
    %v354 = vunpack.c.l.b16 %v226
    %v355 = vunpack.c.l.b16 %v227
    %v356 = vpack.c.b16 %v293, %v292
    %v357 = vpack.c.b16 %v295, %v294
    %v358 = vpack.c.b16 %v297, %v296
    %v359 = vpack.c.b16 %v299, %v298
    %v360 = vpack.c.b16 %v301, %v300
    %v361 = vpack.c.b16 %v303, %v302
    %v362 = vpack.c.b16 %v305, %v304
    %v363 = vpack.c.b16 %v307, %v306
    %v364 = vpack.c.b16 %v309, %v308
    %v365 = vpack.c.b16 %v311, %v310
    %v366 = vpack.c.b16 %v313, %v312
    %v367 = vpack.c.b16 %v315, %v314
    %v368 = vpack.c.b16 %v317, %v316
    %v369 = vpack.c.b16 %v319, %v318
    %v370 = vpack.c.b16 %v321, %v320
    %v371 = vpack.c.b16 %v323, %v322
    %v372 = vpack.c.b16 %v325, %v324
    %v373 = vpack.c.b16 %v327, %v326
    %v374 = vpack.c.b16 %v329, %v328
    %v375 = vpack.c.b16 %v331, %v330
    %v376 = vpack.c.b16 %v333, %v332
    %v377 = vpack.c.b16 %v335, %v334
    %v378 = vpack.c.b16 %v337, %v336
    %v379 = vpack.c.b16 %v339, %v338
    %v380 = vpack.c.b16 %v341, %v340
    %v381 = vpack.c.b16 %v343, %v342
    %v382 = vpack.c.b16 %v345, %v344
    %v383 = vpack.c.b16 %v347, %v346
    %v384 = vpack.c.b16 %v349, %v348
    %v385 = vpack.c.b16 %v351, %v350
    %v386 = vpack.c.b16 %v353, %v352
    %v387 = vpack.c.b16 %v355, %v354
    %420 = vmatpush.bf16.msra.mxu0 %v363
    %421 = vmatpush.bf16.msra.mxu0 %v362
    %422 = vmatpush.bf16.msra.mxu0 %v361
    %423 = vmatpush.bf16.msra.mxu0 %v360
    %424 = vmatpush.bf16.msra.mxu0 %v359
    %425 = vmatpush.bf16.msra.mxu0 %v358
    %426 = vmatpush.bf16.msra.mxu0 %v357
    %427 = vmatpush.bf16.msra.mxu0 %v356
    %428 = vmatmul.bf16.gmra.mxu0 %v156
    %v429 = vpop.f32.mrf.mxu0
    %v430 = vadd.f32 0.0, %v429
    %v431 = vpop.f32.mrf.mxu0
    %v432 = vadd.f32 0.0, %v431
    %433 = vmatmul.bf16.gmra.mxu0 %v160
    %v434 = vpop.f32.mrf.mxu0
    %v435 = vadd.f32 0.0, %v434
    %v436 = vpop.f32.mrf.mxu0
    %v437 = vadd.f32 0.0, %v436
    %438 = vdwg.mxu0
    %439 = vmatpush.bf16.msra.mxu0 %v371
    %440 = vmatpush.bf16.msra.mxu0 %v370
    %441 = vmatpush.bf16.msra.mxu0 %v369
    %442 = vmatpush.bf16.msra.mxu0 %v368
    %443 = vmatpush.bf16.msra.mxu0 %v367
    %444 = vmatpush.bf16.msra.mxu0 %v366
    %445 = vmatpush.bf16.msra.mxu0 %v365
    %446 = vmatpush.bf16.msra.mxu0 %v364
    %447 = vmatmul.bf16.gmra.mxu0 %v157
    %v448 = vpop.f32.mrf.mxu0
    %v449 = vadd.f32 %v430, %v448
    %v450 = vpop.f32.mrf.mxu0
    %v451 = vadd.f32 %v432, %v450
    %452 = vmatmul.bf16.gmra.mxu0 %v161
    %v453 = vpop.f32.mrf.mxu0
    %v454 = vadd.f32 %v435, %v453
    %v455 = vpop.f32.mrf.mxu0
    %v456 = vadd.f32 %v437, %v455
    %457 = vdwg.mxu0
    %458 = vmatpush.bf16.msra.mxu0 %v379
    %459 = vmatpush.bf16.msra.mxu0 %v378
    %460 = vmatpush.bf16.msra.mxu0 %v377
    %461 = vmatpush.bf16.msra.mxu0 %v376
    %462 = vmatpush.bf16.msra.mxu0 %v375
    %463 = vmatpush.bf16.msra.mxu0 %v374
    %464 = vmatpush.bf16.msra.mxu0 %v373
    %465 = vmatpush.bf16.msra.mxu0 %v372
    %466 = vmatmul.bf16.gmra.mxu0 %v158
    %v467 = vpop.f32.mrf.mxu0
    %v468 = vadd.f32 %v449, %v467
    %v469 = vpop.f32.mrf.mxu0
    %v470 = vadd.f32 %v451, %v469
    %471 = vmatmul.bf16.gmra.mxu0 %v162
    %v472 = vpop.f32.mrf.mxu0
    %v473 = vadd.f32 %v454, %v472
    %v474 = vpop.f32.mrf.mxu0
    %v475 = vadd.f32 %v456, %v474
    %476 = vdwg.mxu0
    %477 = vmatpush.bf16.msra.mxu0 %v387
    %478 = vmatpush.bf16.msra.mxu0 %v386
    %479 = vmatpush.bf16.msra.mxu0 %v385
    %480 = vmatpush.bf16.msra.mxu0 %v384
    %481 = vmatpush.bf16.msra.mxu0 %v383
    %482 = vmatpush.bf16.msra.mxu0 %v382
    %483 = vmatpush.bf16.msra.mxu0 %v381
    %484 = vmatpush.bf16.msra.mxu0 %v380
    %485 = vmatmul.bf16.gmra.mxu0 %v159
    %v486 = vpop.f32.mrf.mxu0
    %v487 = vadd.f32 %v468, %v486
    %v488 = vpop.f32.mrf.mxu0
    %v489 = vadd.f32 %v470, %v488
    %490 = vmatmul.bf16.gmra.mxu0 %v163
    %v491 = vpop.f32.mrf.mxu0
    %v492 = vadd.f32 %v473, %v491
    %v493 = vpop.f32.mrf.mxu0
    %v494 = vadd.f32 %v475, %v493
    %495 = vdwg.mxu0
    %vm496 = vcmask 261120
    %v498 = vsel %vm496, 1.0, 0
    %500 = vmatpush.msra.mxu0 0.0
    %501 = vmatpush.msra.mxu0 0.0
    %502 = vmatpush.msra.mxu0 0.0
    %503 = vmatpush.msra.mxu0 0.0
    %504 = vmatpush.msra.mxu0 0.0
    %505 = vmatpush.msra.mxu0 0.0
    %506 = vmatpush.msra.mxu0 0.0
    %507 = vmatpush.msra.mxu0 0.0
    %508 = vmatpush.msra.mxu0 0.0
    %509 = vmatpush.msra.mxu0 0.0
    %510 = vmatpush.msra.mxu0 0.0
    %511 = vmatpush.msra.mxu0 0.0
    %512 = vmatpush.msra.mxu0 %v494
    %513 = vmatpush.msra.mxu0 %v492
    %514 = vmatpush.msra.mxu0 %v489
    %515 = vmatpush.msra.mxu0 %v487
    %516 = vmatmul.f32.gmra.mxu0 %v498
    %v517 = vpop.f32.mrf.mxu0
    %v518 = vadd.f32 0.0, %v517
    %519 = vdwg.mxu0
    %v520 = vmul.f32 %v487, %v487
    %v521 = vmul.f32 %v489, %v489
    %v522 = vmul.f32 %v492, %v492
    %v523 = vmul.f32 %v494, %v494
    %524 = vmatpush.msra.mxu0 0.0
    %525 = vmatpush.msra.mxu0 0.0
    %526 = vmatpush.msra.mxu0 0.0
    %527 = vmatpush.msra.mxu0 0.0
    %528 = vmatpush.msra.mxu0 0.0
    %529 = vmatpush.msra.mxu0 0.0
    %530 = vmatpush.msra.mxu0 0.0
    %531 = vmatpush.msra.mxu0 0.0
    %532 = vmatpush.msra.mxu0 0.0
    %533 = vmatpush.msra.mxu0 0.0
    %534 = vmatpush.msra.mxu0 0.0
    %535 = vmatpush.msra.mxu0 0.0
    %536 = vmatpush.msra.mxu0 %v523
    %537 = vmatpush.msra.mxu0 %v522
    %538 = vmatpush.msra.mxu0 %v521
    %539 = vmatpush.msra.mxu0 %v520
    %540 = vmatmul.f32.gmra.mxu0 %v498
    %v541 = vpop.f32.mrf.mxu0
    %v542 = vadd.f32 0.0, %v541
    %543 = vdwg.mxu0
    %v544 = vld [vmem:[%s4] sm:$0xff]
    %v545 = vld [vmem:[%s4 + $0x8] sm:$0xff]
    %v546 = vld [vmem:[%s4 + $0x10] sm:$0xff]
    %v547 = vld [vmem:[%s4 + $0x18] sm:$0xff]
    %v548 = vld [vmem:[%s4 + $0x20] sm:$0xff]
    %v549 = vld [vmem:[%s4 + $0x28] sm:$0xff]
    %v550 = vld [vmem:[%s4 + $0x30] sm:$0xff]
    %v551 = vld [vmem:[%s4 + $0x38] sm:$0xff]
    %v552 = vld [vmem:[%s4 + $0x40] sm:$0xff]
    %v553 = vld [vmem:[%s4 + $0x48] sm:$0xff]
    %v554 = vld [vmem:[%s4 + $0x50] sm:$0xff]
    %v555 = vld [vmem:[%s4 + $0x58] sm:$0xff]
    %v556 = vld [vmem:[%s4 + $0x60] sm:$0xff]
    %v557 = vld [vmem:[%s4 + $0x68] sm:$0xff]
    %v558 = vld [vmem:[%s4 + $0x70] sm:$0xff]
    %v559 = vld [vmem:[%s4 + $0x78] sm:$0xff]
    %560 = vmatpush.msra.mxu0 %v559
    %561 = vmatpush.msra.mxu0 %v558
    %562 = vmatpush.msra.mxu0 %v557
    %563 = vmatpush.msra.mxu0 %v556
    %564 = vmatpush.msra.mxu0 %v555
    %565 = vmatpush.msra.mxu0 %v554
    %566 = vmatpush.msra.mxu0 %v553
    %567 = vmatpush.msra.mxu0 %v552
    %568 = vmatpush.msra.mxu0 %v551
    %569 = vmatpush.msra.mxu0 %v550
    %570 = vmatpush.msra.mxu0 %v549
    %571 = vmatpush.msra.mxu0 %v548
    %572 = vmatpush.msra.mxu0 %v547
    %573 = vmatpush.msra.mxu0 %v546
    %574 = vmatpush.msra.mxu0 %v545
    %575 = vmatpush.msra.mxu0 %v544
    %576 = vmatmul.f32.gmra.mxu0 %v518
    %v577 = vpop.f32.mrf.mxu0
    %v578 = vadd.f32 0.0, %v577
    %579 = vdwg.mxu0
    %v580 = vmul.f32 %v578, 0.001953125
    %581 = vmatpush.msra.mxu0 %v559
    %582 = vmatpush.msra.mxu0 %v558
    %583 = vmatpush.msra.mxu0 %v557
    %584 = vmatpush.msra.mxu0 %v556
    %585 = vmatpush.msra.mxu0 %v555
    %586 = vmatpush.msra.mxu0 %v554
    %587 = vmatpush.msra.mxu0 %v553
    %588 = vmatpush.msra.mxu0 %v552
    %589 = vmatpush.msra.mxu0 %v551
    %590 = vmatpush.msra.mxu0 %v550
    %591 = vmatpush.msra.mxu0 %v549
    %592 = vmatpush.msra.mxu0 %v548
    %593 = vmatpush.msra.mxu0 %v547
    %594 = vmatpush.msra.mxu0 %v546
    %595 = vmatpush.msra.mxu0 %v545
    %596 = vmatpush.msra.mxu0 %v544
    %597 = vmatmul.f32.gmra.mxu0 %v542
    %v598 = vpop.f32.mrf.mxu0
    %v599 = vadd.f32 0.0, %v598
    %600 = vdwg.mxu0
    %v601 = vmul.f32 %v599, 0.001953125
    %v602 = vmul.f32 %v580, %v580
    %v603 = vsub.f32 %v601, %v602
    %v604 = vld [vmem:[%s2] sm:$0x1]
    %v605 = vadd.f32 %v603, 1e-05
    %v606 = vrsqrt.pop %v605
    %v607 = vmul.f32 %v606, %v605
    %v608 = vmul.f32 %v607, %v606
    %v609 = vmul.f32 0.5, %v608
    %v610 = vsub.f32 1.5, %v609
    %v611 = vmul.f32 %v606, %v610
    %vm612 = vweird.f32 %v605
    %vm613 = vweird.f32 %v606
    %vm614 = vmor %vm612, %vm613
    %v615 = vsel %vm614, %v606, %v611
    %v616 = vmul.f32 %v604, %v615
    %v617 = vld [vmem:[%s3] sm:$0x1]
    %v618 = vmul.f32 %v580, %v616
    %v619 = vsub.f32 %v617, %v618
    %v621 = vperm.slane %v616, 0
    %v623 = vmul.f32 %v487, %v621
    %v624 = vmul.f32 %v489, %v621
    %v625 = vmul.f32 %v492, %v621
    %v626 = vmul.f32 %v494, %v621
    %v628 = vperm.slane %v619, 0
    %v630 = vadd.f32 %v623, %v628
    %v631 = vadd.f32 %v624, %v628
    %v632 = vadd.f32 %v625, %v628
    %v633 = vadd.f32 %v626, %v628
    %vm634 = vcmp.ge.f32.partialorder %v630, 0.0
    %vm635 = vcmp.ge.f32.partialorder %v631, 0.0
    %vm636 = vcmp.ge.f32.partialorder %v632, 0.0
    %vm637 = vcmp.ge.f32.partialorder %v633, 0.0
    %v638 = vmul.f32 %v630, 0.2
    %v639 = vmul.f32 %v631, 0.2
    %v640 = vmul.f32 %v632, 0.2
    %v641 = vmul.f32 %v633, 0.2
    %v642 = vsel %vm634, %v630, %v638
    %v643 = vsel %vm635, %v631, %v639
    %v644 = vsel %vm636, %v632, %v640
    %v645 = vsel %vm637, %v633, %v641
    %646 = vst [vmem:[#allocation2] sm:$0xff] 0.0
    %647 = vst [vmem:[#allocation2 + $0x8] sm:$0xff] 0.0
    %648 = vst [vmem:[#allocation2 + $0x10] sm:$0xff] 0.0
    %649 = vst [vmem:[#allocation2 + $0x18] sm:$0xff] 0.0
    %650 = vst [vmem:[#allocation2 + $0x20] sm:$0xf] 0.0
    %651 = vst [vmem:[#allocation2 + $0x1] sm:$0xff] %v642
    %652 = vst [vmem:[#allocation2 + $0x9] sm:$0xff] %v643
    %653 = vst [vmem:[#allocation2 + $0x13] sm:$0xff] %v644
    %654 = vst [vmem:[#allocation2 + $0x1b] sm:$0xff] %v645
    %v655 = vld [vmem:[#allocation2] ss:$2 sm:$0xff]
    %s656 = scalar_lea.vmem [#allocation2], 18
    %v657 = vld [vmem:[%s656] ss:$2 sm:$0xff]
    %s658 = scalar_lea.vmem [#allocation2], 1
    %v659 = vld [vmem:[%s658] ss:$2 sm:$0xff]
    %s660 = scalar_lea.vmem [#allocation2], 19
    %v661 = vld [vmem:[%s660] ss:$2 sm:$0xff]
    %s662 = scalar_lea.vmem [#allocation2], 2
    %v663 = vld [vmem:[%s662] ss:$2 sm:$0xff]
    %s664 = scalar_lea.vmem [#allocation2], 20
    %v665 = vld [vmem:[%s664] ss:$2 sm:$0xff]
    %s666 = scalar_lea.vmem [#allocation2], 3
    %v667 = vld [vmem:[%s666] ss:$2 sm:$0xff]
    %s668 = scalar_lea.vmem [#allocation2], 21
    %v669 = vld [vmem:[%s668] ss:$2 sm:$0xff]
    %v670 = vpack.c.bf16 %v657, %v655
    %v671 = vpack.c.bf16 %v661, %v659
    %v672 = vpack.c.bf16 %v665, %v663
    %v673 = vpack.c.bf16 %v669, %v667
    %v674 = vld [vmem:[%s5] sm:$0xf]
    %v675 = vld [vmem:[%s5 + $0x4] sm:$0xf]
    %v676 = vld [vmem:[%s5 + $0x8] sm:$0xf]
    %v677 = vld [vmem:[%s5 + $0xc] sm:$0xf]
    %v678 = vld [vmem:[%s5 + $0x10] sm:$0xf]
    %v679 = vld [vmem:[%s5 + $0x14] sm:$0xf]
    %v680 = vld [vmem:[%s5 + $0x18] sm:$0xf]
    %v681 = vld [vmem:[%s5 + $0x1c] sm:$0xf]
    %v682 = vld [vmem:[%s5 + $0x20] sm:$0xf]
    %v683 = vld [vmem:[%s5 + $0x24] sm:$0xf]
    %v684 = vld [vmem:[%s5 + $0x28] sm:$0xf]
    %v685 = vld [vmem:[%s5 + $0x2c] sm:$0xf]
    %v686 = vld [vmem:[%s5 + $0x30] sm:$0xf]
    %v687 = vld [vmem:[%s5 + $0x34] sm:$0xf]
    %v688 = vld [vmem:[%s5 + $0x38] sm:$0xf]
    %v689 = vld [vmem:[%s5 + $0x3c] sm:$0xf]
    %v690 = vld [vmem:[%s5 + $0x40] sm:$0xf]
    %v691 = vld [vmem:[%s5 + $0x44] sm:$0xf]
    %v692 = vld [vmem:[%s5 + $0x48] sm:$0xf]
    %v693 = vld [vmem:[%s5 + $0x4c] sm:$0xf]
    %v694 = vld [vmem:[%s5 + $0x50] sm:$0xf]
    %v695 = vld [vmem:[%s5 + $0x54] sm:$0xf]
    %v696 = vld [vmem:[%s5 + $0x58] sm:$0xf]
    %v697 = vld [vmem:[%s5 + $0x5c] sm:$0xf]
    %v698 = vld [vmem:[%s5 + $0x60] sm:$0xf]
    %v699 = vld [vmem:[%s5 + $0x64] sm:$0xf]
    %v700 = vld [vmem:[%s5 + $0x68] sm:$0xf]
    %v701 = vld [vmem:[%s5 + $0x6c] sm:$0xf]
    %v702 = vld [vmem:[%s5 + $0x70] sm:$0xf]
    %v703 = vld [vmem:[%s5 + $0x74] sm:$0xf]
    %v704 = vld [vmem:[%s5 + $0x78] sm:$0xf]
    %v705 = vld [vmem:[%s5 + $0x7c] sm:$0xf]
    %v706 = vld [vmem:[%s5 + $0x80] sm:$0xf]
    %v707 = vld [vmem:[%s5 + $0x84] sm:$0xf]
    %v708 = vld [vmem:[%s5 + $0x88] sm:$0xf]
    %v709 = vld [vmem:[%s5 + $0x8c] sm:$0xf]
    %v710 = vld [vmem:[%s5 + $0x90] sm:$0xf]
    %v711 = vld [vmem:[%s5 + $0x94] sm:$0xf]
    %v712 = vld [vmem:[%s5 + $0x98] sm:$0xf]
    %v713 = vld [vmem:[%s5 + $0x9c] sm:$0xf]
    %v714 = vld [vmem:[%s5 + $0xa0] sm:$0xf]
    %v715 = vld [vmem:[%s5 + $0xa4] sm:$0xf]
    %v716 = vld [vmem:[%s5 + $0xa8] sm:$0xf]
    %v717 = vld [vmem:[%s5 + $0xac] sm:$0xf]
    %v718 = vld [vmem:[%s5 + $0xb0] sm:$0xf]
    %v719 = vld [vmem:[%s5 + $0xb4] sm:$0xf]
    %v720 = vld [vmem:[%s5 + $0xb8] sm:$0xf]
    %v721 = vld [vmem:[%s5 + $0xbc] sm:$0xf]
    %v722 = vld [vmem:[%s5 + $0xc0] sm:$0xf]
    %v723 = vld [vmem:[%s5 + $0xc4] sm:$0xf]
    %v724 = vld [vmem:[%s5 + $0xc8] sm:$0xf]
    %v725 = vld [vmem:[%s5 + $0xcc] sm:$0xf]
    %v726 = vld [vmem:[%s5 + $0xd0] sm:$0xf]
    %v727 = vld [vmem:[%s5 + $0xd4] sm:$0xf]
    %v728 = vld [vmem:[%s5 + $0xd8] sm:$0xf]
    %v729 = vld [vmem:[%s5 + $0xdc] sm:$0xf]
    %v730 = vld [vmem:[%s5 + $0xe0] sm:$0xf]
    %v731 = vld [vmem:[%s5 + $0xe4] sm:$0xf]
    %v732 = vld [vmem:[%s5 + $0xe8] sm:$0xf]
    %v733 = vld [vmem:[%s5 + $0xec] sm:$0xf]
    %v734 = vld [vmem:[%s5 + $0xf0] sm:$0xf]
    %v735 = vld [vmem:[%s5 + $0xf4] sm:$0xf]
    %v736 = vld [vmem:[%s5 + $0xf8] sm:$0xf]
    %v737 = vld [vmem:[%s5 + $0xfc] sm:$0xf]
    %v802 = vunpack.c.l.b16 %v674
    %v803 = vunpack.c.l.b16 %v675
    %v804 = vunpack.c.l.b16 %v676
    %v805 = vunpack.c.l.b16 %v677
    %v806 = vunpack.c.l.b16 %v678
    %v807 = vunpack.c.l.b16 %v679
    %v808 = vunpack.c.l.b16 %v680
    %v809 = vunpack.c.l.b16 %v681
    %v810 = vunpack.c.l.b16 %v682
    %v811 = vunpack.c.l.b16 %v683
    %v812 = vunpack.c.l.b16 %v684
    %v813 = vunpack.c.l.b16 %v685
    %v814 = vunpack.c.l.b16 %v686
    %v815 = vunpack.c.l.b16 %v687
    %v816 = vunpack.c.l.b16 %v688
    %v817 = vunpack.c.l.b16 %v689
    %v818 = vunpack.c.l.b16 %v690
    %v819 = vunpack.c.l.b16 %v691
    %v820 = vunpack.c.l.b16 %v692
    %v821 = vunpack.c.l.b16 %v693
    %v822 = vunpack.c.l.b16 %v694
    %v823 = vunpack.c.l.b16 %v695
    %v824 = vunpack.c.l.b16 %v696
    %v825 = vunpack.c.l.b16 %v697
    %v826 = vunpack.c.l.b16 %v698
    %v827 = vunpack.c.l.b16 %v699
    %v828 = vunpack.c.l.b16 %v700
    %v829 = vunpack.c.l.b16 %v701
    %v830 = vunpack.c.l.b16 %v702
    %v831 = vunpack.c.l.b16 %v703
    %v832 = vunpack.c.l.b16 %v704
    %v833 = vunpack.c.l.b16 %v705
    %v834 = vunpack.c.l.b16 %v706
    %v835 = vunpack.c.l.b16 %v707
    %v836 = vunpack.c.l.b16 %v708
    %v837 = vunpack.c.l.b16 %v709
    %v838 = vunpack.c.l.b16 %v710
    %v839 = vunpack.c.l.b16 %v711
    %v840 = vunpack.c.l.b16 %v712
    %v841 = vunpack.c.l.b16 %v713
    %v842 = vunpack.c.l.b16 %v714
    %v843 = vunpack.c.l.b16 %v715
    %v844 = vunpack.c.l.b16 %v716
    %v845 = vunpack.c.l.b16 %v717
    %v846 = vunpack.c.l.b16 %v718
    %v847 = vunpack.c.l.b16 %v719
    %v848 = vunpack.c.l.b16 %v720
    %v849 = vunpack.c.l.b16 %v721
    %v850 = vunpack.c.l.b16 %v722
    %v851 = vunpack.c.l.b16 %v723
    %v852 = vunpack.c.l.b16 %v724
    %v853 = vunpack.c.l.b16 %v725
    %v854 = vunpack.c.l.b16 %v726
    %v855 = vunpack.c.l.b16 %v727
    %v856 = vunpack.c.l.b16 %v728
    %v857 = vunpack.c.l.b16 %v729
    %v858 = vunpack.c.l.b16 %v730
    %v859 = vunpack.c.l.b16 %v731
    %v860 = vunpack.c.l.b16 %v732
    %v861 = vunpack.c.l.b16 %v733
    %v862 = vunpack.c.l.b16 %v734
    %v863 = vunpack.c.l.b16 %v735
    %v864 = vunpack.c.l.b16 %v736
    %v865 = vunpack.c.l.b16 %v737
    %v866 = vpack.c.b16 %v803, %v802
    %v867 = vpack.c.b16 %v805, %v804
    %v868 = vpack.c.b16 %v807, %v806
    %v869 = vpack.c.b16 %v809, %v808
    %v870 = vpack.c.b16 %v811, %v810
    %v871 = vpack.c.b16 %v813, %v812
    %v872 = vpack.c.b16 %v815, %v814
    %v873 = vpack.c.b16 %v817, %v816
    %v874 = vpack.c.b16 %v819, %v818
    %v875 = vpack.c.b16 %v821, %v820
    %v876 = vpack.c.b16 %v823, %v822
    %v877 = vpack.c.b16 %v825, %v824
    %v878 = vpack.c.b16 %v827, %v826
    %v879 = vpack.c.b16 %v829, %v828
    %v880 = vpack.c.b16 %v831, %v830
    %v881 = vpack.c.b16 %v833, %v832
    %v882 = vpack.c.b16 %v835, %v834
    %v883 = vpack.c.b16 %v837, %v836
    %v884 = vpack.c.b16 %v839, %v838
    %v885 = vpack.c.b16 %v841, %v840
    %v886 = vpack.c.b16 %v843, %v842
    %v887 = vpack.c.b16 %v845, %v844
    %v888 = vpack.c.b16 %v847, %v846
    %v889 = vpack.c.b16 %v849, %v848
    %v890 = vpack.c.b16 %v851, %v850
    %v891 = vpack.c.b16 %v853, %v852
    %v892 = vpack.c.b16 %v855, %v854
    %v893 = vpack.c.b16 %v857, %v856
    %v894 = vpack.c.b16 %v859, %v858
    %v895 = vpack.c.b16 %v861, %v860
    %v896 = vpack.c.b16 %v863, %v862
    %v897 = vpack.c.b16 %v865, %v864
    %930 = vmatpush.bf16.msra.mxu0 %v873
    %931 = vmatpush.bf16.msra.mxu0 %v872
    %932 = vmatpush.bf16.msra.mxu0 %v871
    %933 = vmatpush.bf16.msra.mxu0 %v870
    %934 = vmatpush.bf16.msra.mxu0 %v869
    %935 = vmatpush.bf16.msra.mxu0 %v868
    %936 = vmatpush.bf16.msra.mxu0 %v867
    %937 = vmatpush.bf16.msra.mxu0 %v866
    %938 = vmatmul.bf16.gmra.mxu0 %v670
    %v939 = vpop.f32.mrf.mxu0
    %v940 = vadd.f32 0.0, %v939
    %v941 = vpop.f32.mrf.mxu0
    %v942 = vadd.f32 0.0, %v941
    %943 = vdwg.mxu0
    %944 = vmatpush.bf16.msra.mxu0 %v881
    %945 = vmatpush.bf16.msra.mxu0 %v880
    %946 = vmatpush.bf16.msra.mxu0 %v879
    %947 = vmatpush.bf16.msra.mxu0 %v878
    %948 = vmatpush.bf16.msra.mxu0 %v877
    %949 = vmatpush.bf16.msra.mxu0 %v876
    %950 = vmatpush.bf16.msra.mxu0 %v875
    %951 = vmatpush.bf16.msra.mxu0 %v874
    %952 = vmatmul.bf16.gmra.mxu0 %v671
    %v953 = vpop.f32.mrf.mxu0
    %v954 = vadd.f32 %v940, %v953
    %v955 = vpop.f32.mrf.mxu0
    %v956 = vadd.f32 %v942, %v955
    %957 = vdwg.mxu0
    %958 = vmatpush.bf16.msra.mxu0 %v889
    %959 = vmatpush.bf16.msra.mxu0 %v888
    %960 = vmatpush.bf16.msra.mxu0 %v887
    %961 = vmatpush.bf16.msra.mxu0 %v886
    %962 = vmatpush.bf16.msra.mxu0 %v885
    %963 = vmatpush.bf16.msra.mxu0 %v884
    %964 = vmatpush.bf16.msra.mxu0 %v883
    %965 = vmatpush.bf16.msra.mxu0 %v882
    %966 = vmatmul.bf16.gmra.mxu0 %v672
    %v967 = vpop.f32.mrf.mxu0
    %v968 = vadd.f32 %v954, %v967
    %v969 = vpop.f32.mrf.mxu0
    %v970 = vadd.f32 %v956, %v969
    %971 = vdwg.mxu0
    %972 = vmatpush.bf16.msra.mxu0 %v897
    %973 = vmatpush.bf16.msra.mxu0 %v896
    %974 = vmatpush.bf16.msra.mxu0 %v895
    %975 = vmatpush.bf16.msra.mxu0 %v894
    %976 = vmatpush.bf16.msra.mxu0 %v893
    %977 = vmatpush.bf16.msra.mxu0 %v892
    %978 = vmatpush.bf16.msra.mxu0 %v891
    %979 = vmatpush.bf16.msra.mxu0 %v890
    %980 = vmatmul.bf16.gmra.mxu0 %v673
    %v981 = vpop.f32.mrf.mxu0
    %v982 = vadd.f32 %v968, %v981
    %v983 = vpop.f32.mrf.mxu0
    %v984 = vadd.f32 %v970, %v983
    %985 = vdwg.mxu0
    %vm986 = vcmask 130048
    %v987 = vsel %vm986, 1.0, 0
    %989 = vmatpush.msra.mxu0 0.0
    %990 = vmatpush.msra.mxu0 0.0
    %991 = vmatpush.msra.mxu0 0.0
    %992 = vmatpush.msra.mxu0 0.0
    %993 = vmatpush.msra.mxu0 0.0
    %994 = vmatpush.msra.mxu0 0.0
    %995 = vmatpush.msra.mxu0 0.0
    %996 = vmatpush.msra.mxu0 0.0
    %997 = vmatpush.msra.mxu0 0.0
    %998 = vmatpush.msra.mxu0 0.0
    %999 = vmatpush.msra.mxu0 0.0
    %1000 = vmatpush.msra.mxu0 0.0
    %1001 = vmatpush.msra.mxu0 0.0
    %1002 = vmatpush.msra.mxu0 0.0
    %1003 = vmatpush.msra.mxu0 %v984
    %1004 = vmatpush.msra.mxu0 %v982
    %1005 = vmatmul.f32.gmra.mxu0 %v987
    %v1006 = vpop.f32.mrf.mxu0
    %v1007 = vadd.f32 0.0, %v1006
    %1008 = vdwg.mxu0
    %v1009 = vmul.f32 %v982, %v982
    %v1010 = vmul.f32 %v984, %v984
    %1011 = vmatpush.msra.mxu0 0.0
    %1012 = vmatpush.msra.mxu0 0.0
    %1013 = vmatpush.msra.mxu0 0.0
    %1014 = vmatpush.msra.mxu0 0.0
    %1015 = vmatpush.msra.mxu0 0.0
    %1016 = vmatpush.msra.mxu0 0.0
    %1017 = vmatpush.msra.mxu0 0.0
    %1018 = vmatpush.msra.mxu0 0.0
    %1019 = vmatpush.msra.mxu0 0.0
    %1020 = vmatpush.msra.mxu0 0.0
    %1021 = vmatpush.msra.mxu0 0.0
    %1022 = vmatpush.msra.mxu0 0.0
    %1023 = vmatpush.msra.mxu0 0.0
    %1024 = vmatpush.msra.mxu0 0.0
    %1025 = vmatpush.msra.mxu0 %v1010
    %1026 = vmatpush.msra.mxu0 %v1009
    %1027 = vmatmul.f32.gmra.mxu0 %v987
    %v1028 = vpop.f32.mrf.mxu0
    %v1029 = vadd.f32 0.0, %v1028
    %1030 = vdwg.mxu0
    %v1031 = vld [vmem:[#allocation5] sm:$0xff]
    %v1032 = vld [vmem:[#allocation5 + $0x8] sm:$0xff]
    %v1033 = vld [vmem:[#allocation5 + $0x10] sm:$0xff]
    %v1034 = vld [vmem:[#allocation5 + $0x18] sm:$0xff]
    %v1035 = vld [vmem:[#allocation5 + $0x20] sm:$0xff]
    %v1036 = vld [vmem:[#allocation5 + $0x28] sm:$0xff]
    %v1037 = vld [vmem:[#allocation5 + $0x30] sm:$0xff]
    %v1038 = vld [vmem:[#allocation5 + $0x38] sm:$0xff]
    %v1039 = vld [vmem:[#allocation5 + $0x40] sm:$0xff]
    %v1040 = vld [vmem:[#allocation5 + $0x48] sm:$0xff]
    %v1041 = vld [vmem:[#allocation5 + $0x50] sm:$0xff]
    %v1042 = vld [vmem:[#allocation5 + $0x58] sm:$0xff]
    %v1043 = vld [vmem:[#allocation5 + $0x60] sm:$0xff]
    %v1044 = vld [vmem:[#allocation5 + $0x68] sm:$0xff]
    %v1045 = vld [vmem:[#allocation5 + $0x70] sm:$0xff]
    %v1046 = vld [vmem:[#allocation5 + $0x78] sm:$0xff]
    %1047 = vmatpush.msra.mxu0 %v1046
    %1048 = vmatpush.msra.mxu0 %v1045
    %1049 = vmatpush.msra.mxu0 %v1044
    %1050 = vmatpush.msra.mxu0 %v1043
    %1051 = vmatpush.msra.mxu0 %v1042
    %1052 = vmatpush.msra.mxu0 %v1041
    %1053 = vmatpush.msra.mxu0 %v1040
    %1054 = vmatpush.msra.mxu0 %v1039
    %1055 = vmatpush.msra.mxu0 %v1038
    %1056 = vmatpush.msra.mxu0 %v1037
    %1057 = vmatpush.msra.mxu0 %v1036
    %1058 = vmatpush.msra.mxu0 %v1035
    %1059 = vmatpush.msra.mxu0 %v1034
    %1060 = vmatpush.msra.mxu0 %v1033
    %1061 = vmatpush.msra.mxu0 %v1032
    %1062 = vmatpush.msra.mxu0 %v1031
    %1063 = vmatmul.f32.gmra.mxu0 %v1007
    %v1064 = vpop.f32.mrf.mxu0
    %v1065 = vadd.f32 0.0, %v1064
    %1066 = vdwg.mxu0
    %v1067 = vmul.f32 %v1065, 0.0078125
    %1068 = vmatpush.msra.mxu0 %v1046
    %1069 = vmatpush.msra.mxu0 %v1045
    %1070 = vmatpush.msra.mxu0 %v1044
    %1071 = vmatpush.msra.mxu0 %v1043
    %1072 = vmatpush.msra.mxu0 %v1042
    %1073 = vmatpush.msra.mxu0 %v1041
    %1074 = vmatpush.msra.mxu0 %v1040
    %1075 = vmatpush.msra.mxu0 %v1039
    %1076 = vmatpush.msra.mxu0 %v1038
    %1077 = vmatpush.msra.mxu0 %v1037
    %1078 = vmatpush.msra.mxu0 %v1036
    %1079 = vmatpush.msra.mxu0 %v1035
    %1080 = vmatpush.msra.mxu0 %v1034
    %1081 = vmatpush.msra.mxu0 %v1033
    %1082 = vmatpush.msra.mxu0 %v1032
    %1083 = vmatpush.msra.mxu0 %v1031
    %1084 = vmatmul.f32.gmra.mxu0 %v1029
    %v1085 = vpop.f32.mrf.mxu0
    %v1086 = vadd.f32 0.0, %v1085
    %1087 = vdwg.mxu0
    %v1088 = vmul.f32 %v1086, 0.0078125
    %v1089 = vmul.f32 %v1067, %v1067
    %v1090 = vsub.f32 %v1088, %v1089
    %v1091 = vld [vmem:[%s6] sm:$0x1]
    %v1092 = vadd.f32 %v1090, 1e-05
    %v1093 = vrsqrt.pop %v1092
    %v1094 = vmul.f32 %v1093, %v1092
    %v1095 = vmul.f32 %v1094, %v1093
    %v1096 = vmul.f32 0.5, %v1095
    %v1097 = vsub.f32 1.5, %v1096
    %v1098 = vmul.f32 %v1093, %v1097
    %vm1099 = vweird.f32 %v1092
    %vm1100 = vweird.f32 %v1093
    %vm1101 = vmor %vm1099, %vm1100
    %v1102 = vsel %vm1101, %v1093, %v1098
    %v1103 = vmul.f32 %v1091, %v1102
    %v1104 = vld [vmem:[%s7] sm:$0x1]
    %v1105 = vmul.f32 %v1067, %v1103
    %v1106 = vsub.f32 %v1104, %v1105
    %v1108 = vperm.slane %v1103, 0
    %v1110 = vmul.f32 %v982, %v1108
    %v1111 = vmul.f32 %v984, %v1108
    %v1113 = vperm.slane %v1106, 0
    %v1115 = vadd.f32 %v1110, %v1113
    %v1116 = vadd.f32 %v1111, %v1113
    %vm1117 = vcmp.ge.f32.partialorder %v1115, 0.0
    %vm1118 = vcmp.ge.f32.partialorder %v1116, 0.0
    %v1119 = vmul.f32 %v1115, 0.2
    %v1120 = vmul.f32 %v1116, 0.2
    %v1121 = vsel %vm1117, %v1115, %v1119
    %v1122 = vsel %vm1118, %v1116, %v1120
    %1123 = vst [vmem:[#allocation3] sm:$0xff] 0.0
    %1124 = vst [vmem:[#allocation3 + $0x8] sm:$0xff] 0.0
    %1125 = vst [vmem:[#allocation3 + $0x10] sm:$0xf] 0.0
    %1126 = vst [vmem:[#allocation3 + $0x1] sm:$0xff] %v1121
    %1127 = vst [vmem:[#allocation3 + $0xb] sm:$0xff] %v1122
    %v1128 = vld [vmem:[#allocation3] ss:$2 sm:$0xf]
    %s1129 = scalar_lea.vmem [#allocation3], 10
    %v1130 = vld [vmem:[%s1129] ss:$2 sm:$0xf]
    %v1132 = vrot.slane %v1130, 4
    %vm1134 = vcmask 1043456
    %v1135 = vsel %vm1134, %v1128, %v1132
    %s1136 = scalar_lea.vmem [#allocation3], 1
    %v1137 = vld [vmem:[%s1136] ss:$2 sm:$0xf]
    %s1138 = scalar_lea.vmem [#allocation3], 11
    %v1139 = vld [vmem:[%s1138] ss:$2 sm:$0xf]
    %v1141 = vrot.slane %v1139, 4
    %v1143 = vsel %vm1134, %v1137, %v1141
    %s1144 = scalar_lea.vmem [#allocation3], 2
    %v1145 = vld [vmem:[%s1144] ss:$2 sm:$0xf]
    %s1146 = scalar_lea.vmem [#allocation3], 12
    %v1147 = vld [vmem:[%s1146] ss:$2 sm:$0xf]
    %v1149 = vrot.slane %v1147, 4
    %v1151 = vsel %vm1134, %v1145, %v1149
    %s1152 = scalar_lea.vmem [#allocation3], 3
    %v1153 = vld [vmem:[%s1152] ss:$2 sm:$0xf]
    %s1154 = scalar_lea.vmem [#allocation3], 13
    %v1155 = vld [vmem:[%s1154] ss:$2 sm:$0xf]
    %v1157 = vrot.slane %v1155, 4
    %v1159 = vsel %vm1134, %v1153, %v1157
    %v1160 = vpack.c.bf16 %v1135, %v1135
    %v1161 = vpack.c.bf16 %v1143, %v1143
    %v1162 = vpack.c.bf16 %v1151, %v1151
    %v1163 = vpack.c.bf16 %v1159, %v1159
    %v1164 = vld [vmem:[%s9] sm:$0xf]
    %v1165 = vld [vmem:[%s9 + $0x4] sm:$0xf]
    %v1166 = vld [vmem:[%s9 + $0x8] sm:$0xf]
    %v1167 = vld [vmem:[%s9 + $0xc] sm:$0xf]
    %v1168 = vld [vmem:[%s9 + $0x10] sm:$0xf]
    %v1169 = vld [vmem:[%s9 + $0x14] sm:$0xf]
    %v1170 = vld [vmem:[%s9 + $0x18] sm:$0xf]
    %v1171 = vld [vmem:[%s9 + $0x1c] sm:$0xf]
    %v1172 = vld [vmem:[%s9 + $0x20] sm:$0xf]
    %v1173 = vld [vmem:[%s9 + $0x24] sm:$0xf]
    %v1174 = vld [vmem:[%s9 + $0x28] sm:$0xf]
    %v1175 = vld [vmem:[%s9 + $0x2c] sm:$0xf]
    %v1176 = vld [vmem:[%s9 + $0x30] sm:$0xf]
    %v1177 = vld [vmem:[%s9 + $0x34] sm:$0xf]
    %v1178 = vld [vmem:[%s9 + $0x38] sm:$0xf]
    %v1179 = vld [vmem:[%s9 + $0x3c] sm:$0xf]
    %v1180 = vld [vmem:[%s9 + $0x40] sm:$0xf]
    %v1181 = vld [vmem:[%s9 + $0x44] sm:$0xf]
    %v1182 = vld [vmem:[%s9 + $0x48] sm:$0xf]
    %v1183 = vld [vmem:[%s9 + $0x4c] sm:$0xf]
    %v1184 = vld [vmem:[%s9 + $0x50] sm:$0xf]
    %v1185 = vld [vmem:[%s9 + $0x54] sm:$0xf]
    %v1186 = vld [vmem:[%s9 + $0x58] sm:$0xf]
    %v1187 = vld [vmem:[%s9 + $0x5c] sm:$0xf]
    %v1188 = vld [vmem:[%s9 + $0x60] sm:$0xf]
    %v1189 = vld [vmem:[%s9 + $0x64] sm:$0xf]
    %v1190 = vld [vmem:[%s9 + $0x68] sm:$0xf]
    %v1191 = vld [vmem:[%s9 + $0x6c] sm:$0xf]
    %v1192 = vld [vmem:[%s9 + $0x70] sm:$0xf]
    %v1193 = vld [vmem:[%s9 + $0x74] sm:$0xf]
    %v1194 = vld [vmem:[%s9 + $0x78] sm:$0xf]
    %v1195 = vld [vmem:[%s9 + $0x7c] sm:$0xf]
    %v1196 = vld [vmem:[%s9 + $0x80] sm:$0xf]
    %v1197 = vld [vmem:[%s9 + $0x84] sm:$0xf]
    %v1198 = vld [vmem:[%s9 + $0x88] sm:$0xf]
    %v1199 = vld [vmem:[%s9 + $0x8c] sm:$0xf]
    %v1200 = vld [vmem:[%s9 + $0x90] sm:$0xf]
    %v1201 = vld [vmem:[%s9 + $0x94] sm:$0xf]
    %v1202 = vld [vmem:[%s9 + $0x98] sm:$0xf]
    %v1203 = vld [vmem:[%s9 + $0x9c] sm:$0xf]
    %v1204 = vld [vmem:[%s9 + $0xa0] sm:$0xf]
    %v1205 = vld [vmem:[%s9 + $0xa4] sm:$0xf]
    %v1206 = vld [vmem:[%s9 + $0xa8] sm:$0xf]
    %v1207 = vld [vmem:[%s9 + $0xac] sm:$0xf]
    %v1208 = vld [vmem:[%s9 + $0xb0] sm:$0xf]
    %v1209 = vld [vmem:[%s9 + $0xb4] sm:$0xf]
    %v1210 = vld [vmem:[%s9 + $0xb8] sm:$0xf]
    %v1211 = vld [vmem:[%s9 + $0xbc] sm:$0xf]
    %v1212 = vld [vmem:[%s9 + $0xc0] sm:$0xf]
    %v1213 = vld [vmem:[%s9 + $0xc4] sm:$0xf]
    %v1214 = vld [vmem:[%s9 + $0xc8] sm:$0xf]
    %v1215 = vld [vmem:[%s9 + $0xcc] sm:$0xf]
    %v1216 = vld [vmem:[%s9 + $0xd0] sm:$0xf]
    %v1217 = vld [vmem:[%s9 + $0xd4] sm:$0xf]
    %v1218 = vld [vmem:[%s9 + $0xd8] sm:$0xf]
    %v1219 = vld [vmem:[%s9 + $0xdc] sm:$0xf]
    %v1220 = vld [vmem:[%s9 + $0xe0] sm:$0xf]
    %v1221 = vld [vmem:[%s9 + $0xe4] sm:$0xf]
    %v1222 = vld [vmem:[%s9 + $0xe8] sm:$0xf]
    %v1223 = vld [vmem:[%s9 + $0xec] sm:$0xf]
    %v1224 = vld [vmem:[%s9 + $0xf0] sm:$0xf]
    %v1225 = vld [vmem:[%s9 + $0xf4] sm:$0xf]
    %v1226 = vld [vmem:[%s9 + $0xf8] sm:$0xf]
    %v1227 = vld [vmem:[%s9 + $0xfc] sm:$0xf]
    %v1292 = vunpack.c.l.b16 %v1164
    %v1293 = vunpack.c.l.b16 %v1165
    %v1294 = vunpack.c.l.b16 %v1166
    %v1295 = vunpack.c.l.b16 %v1167
    %v1296 = vunpack.c.l.b16 %v1168
    %v1297 = vunpack.c.l.b16 %v1169
    %v1298 = vunpack.c.l.b16 %v1170
    %v1299 = vunpack.c.l.b16 %v1171
    %v1300 = vunpack.c.l.b16 %v1172
    %v1301 = vunpack.c.l.b16 %v1173
    %v1302 = vunpack.c.l.b16 %v1174
    %v1303 = vunpack.c.l.b16 %v1175
    %v1304 = vunpack.c.l.b16 %v1176
    %v1305 = vunpack.c.l.b16 %v1177
    %v1306 = vunpack.c.l.b16 %v1178
    %v1307 = vunpack.c.l.b16 %v1179
    %v1308 = vunpack.c.l.b16 %v1180
    %v1309 = vunpack.c.l.b16 %v1181
    %v1310 = vunpack.c.l.b16 %v1182
    %v1311 = vunpack.c.l.b16 %v1183
    %v1312 = vunpack.c.l.b16 %v1184
    %v1313 = vunpack.c.l.b16 %v1185
    %v1314 = vunpack.c.l.b16 %v1186
    %v1315 = vunpack.c.l.b16 %v1187
    %v1316 = vunpack.c.l.b16 %v1188
    %v1317 = vunpack.c.l.b16 %v1189
    %v1318 = vunpack.c.l.b16 %v1190
    %v1319 = vunpack.c.l.b16 %v1191
    %v1320 = vunpack.c.l.b16 %v1192
    %v1321 = vunpack.c.l.b16 %v1193
    %v1322 = vunpack.c.l.b16 %v1194
    %v1323 = vunpack.c.l.b16 %v1195
    %v1324 = vunpack.c.l.b16 %v1196
    %v1325 = vunpack.c.l.b16 %v1197
    %v1326 = vunpack.c.l.b16 %v1198
    %v1327 = vunpack.c.l.b16 %v1199
    %v1328 = vunpack.c.l.b16 %v1200
    %v1329 = vunpack.c.l.b16 %v1201
    %v1330 = vunpack.c.l.b16 %v1202
    %v1331 = vunpack.c.l.b16 %v1203
    %v1332 = vunpack.c.l.b16 %v1204
    %v1333 = vunpack.c.l.b16 %v1205
    %v1334 = vunpack.c.l.b16 %v1206
    %v1335 = vunpack.c.l.b16 %v1207
    %v1336 = vunpack.c.l.b16 %v1208
    %v1337 = vunpack.c.l.b16 %v1209
    %v1338 = vunpack.c.l.b16 %v1210
    %v1339 = vunpack.c.l.b16 %v1211
    %v1340 = vunpack.c.l.b16 %v1212
    %v1341 = vunpack.c.l.b16 %v1213
    %v1342 = vunpack.c.l.b16 %v1214
    %v1343 = vunpack.c.l.b16 %v1215
    %v1344 = vunpack.c.l.b16 %v1216
    %v1345 = vunpack.c.l.b16 %v1217
    %v1346 = vunpack.c.l.b16 %v1218
    %v1347 = vunpack.c.l.b16 %v1219
    %v1348 = vunpack.c.l.b16 %v1220
    %v1349 = vunpack.c.l.b16 %v1221
    %v1350 = vunpack.c.l.b16 %v1222
    %v1351 = vunpack.c.l.b16 %v1223
    %v1352 = vunpack.c.l.b16 %v1224
    %v1353 = vunpack.c.l.b16 %v1225
    %v1354 = vunpack.c.l.b16 %v1226
    %v1355 = vunpack.c.l.b16 %v1227
    %v1356 = vpack.c.b16 %v1293, %v1292
    %v1357 = vpack.c.b16 %v1295, %v1294
    %v1358 = vpack.c.b16 %v1297, %v1296
    %v1359 = vpack.c.b16 %v1299, %v1298
    %v1360 = vpack.c.b16 %v1301, %v1300
    %v1361 = vpack.c.b16 %v1303, %v1302
    %v1362 = vpack.c.b16 %v1305, %v1304
    %v1363 = vpack.c.b16 %v1307, %v1306
    %v1364 = vpack.c.b16 %v1309, %v1308
    %v1365 = vpack.c.b16 %v1311, %v1310
    %v1366 = vpack.c.b16 %v1313, %v1312
    %v1367 = vpack.c.b16 %v1315, %v1314
    %v1368 = vpack.c.b16 %v1317, %v1316
    %v1369 = vpack.c.b16 %v1319, %v1318
    %v1370 = vpack.c.b16 %v1321, %v1320
    %v1371 = vpack.c.b16 %v1323, %v1322
    %v1372 = vpack.c.b16 %v1325, %v1324
    %v1373 = vpack.c.b16 %v1327, %v1326
    %v1374 = vpack.c.b16 %v1329, %v1328
    %v1375 = vpack.c.b16 %v1331, %v1330
    %v1376 = vpack.c.b16 %v1333, %v1332
    %v1377 = vpack.c.b16 %v1335, %v1334
    %v1378 = vpack.c.b16 %v1337, %v1336
    %v1379 = vpack.c.b16 %v1339, %v1338
    %v1380 = vpack.c.b16 %v1341, %v1340
    %v1381 = vpack.c.b16 %v1343, %v1342
    %v1382 = vpack.c.b16 %v1345, %v1344
    %v1383 = vpack.c.b16 %v1347, %v1346
    %v1384 = vpack.c.b16 %v1349, %v1348
    %v1385 = vpack.c.b16 %v1351, %v1350
    %v1386 = vpack.c.b16 %v1353, %v1352
    %v1387 = vpack.c.b16 %v1355, %v1354
    %1420 = vmatpush.bf16.msra.mxu0 %v1363
    %1421 = vmatpush.bf16.msra.mxu0 %v1362
    %1422 = vmatpush.bf16.msra.mxu0 %v1361
    %1423 = vmatpush.bf16.msra.mxu0 %v1360
    %1424 = vmatpush.bf16.msra.mxu0 %v1359
    %1425 = vmatpush.bf16.msra.mxu0 %v1358
    %1426 = vmatpush.bf16.msra.mxu0 %v1357
    %1427 = vmatpush.bf16.msra.mxu0 %v1356
    %1428 = vmatmul.bf16.gmra.mxu0 %v1160
    %v1429 = vpop.f32.mrf.mxu0
    %v1430 = vadd.f32 0.0, %v1429
    %v1431 = vpop.f32.mrf.mxu0
    %1432 = vdwg.mxu0
    %1433 = vmatpush.bf16.msra.mxu0 %v1371
    %1434 = vmatpush.bf16.msra.mxu0 %v1370
    %1435 = vmatpush.bf16.msra.mxu0 %v1369
    %1436 = vmatpush.bf16.msra.mxu0 %v1368
    %1437 = vmatpush.bf16.msra.mxu0 %v1367
    %1438 = vmatpush.bf16.msra.mxu0 %v1366
    %1439 = vmatpush.bf16.msra.mxu0 %v1365
    %1440 = vmatpush.bf16.msra.mxu0 %v1364
    %1441 = vmatmul.bf16.gmra.mxu0 %v1161
    %v1442 = vpop.f32.mrf.mxu0
    %v1443 = vadd.f32 %v1430, %v1442
    %v1444 = vpop.f32.mrf.mxu0
    %1445 = vdwg.mxu0
    %1446 = vmatpush.bf16.msra.mxu0 %v1379
    %1447 = vmatpush.bf16.msra.mxu0 %v1378
    %1448 = vmatpush.bf16.msra.mxu0 %v1377
    %1449 = vmatpush.bf16.msra.mxu0 %v1376
    %1450 = vmatpush.bf16.msra.mxu0 %v1375
    %1451 = vmatpush.bf16.msra.mxu0 %v1374
    %1452 = vmatpush.bf16.msra.mxu0 %v1373
    %1453 = vmatpush.bf16.msra.mxu0 %v1372
    %1454 = vmatmul.bf16.gmra.mxu0 %v1162
    %v1455 = vpop.f32.mrf.mxu0
    %v1456 = vadd.f32 %v1443, %v1455
    %v1457 = vpop.f32.mrf.mxu0
    %1458 = vdwg.mxu0
    %1459 = vmatpush.bf16.msra.mxu0 %v1387
    %1460 = vmatpush.bf16.msra.mxu0 %v1386
    %1461 = vmatpush.bf16.msra.mxu0 %v1385
    %1462 = vmatpush.bf16.msra.mxu0 %v1384
    %1463 = vmatpush.bf16.msra.mxu0 %v1383
    %1464 = vmatpush.bf16.msra.mxu0 %v1382
    %1465 = vmatpush.bf16.msra.mxu0 %v1381
    %1466 = vmatpush.bf16.msra.mxu0 %v1380
    %1467 = vmatmul.bf16.gmra.mxu0 %v1163
    %v1468 = vpop.f32.mrf.mxu0
    %v1469 = vadd.f32 %v1456, %v1468
    %v1470 = vpop.f32.mrf.mxu0
    %1471 = vdwg.mxu0
    %vm1472 = vcmask 64512
    %v1473 = vsel %vm1472, 1.0, 0
    %1475 = vmatpush.msra.mxu0 0.0
    %1476 = vmatpush.msra.mxu0 0.0
    %1477 = vmatpush.msra.mxu0 0.0
    %1478 = vmatpush.msra.mxu0 0.0
    %1479 = vmatpush.msra.mxu0 0.0
    %1480 = vmatpush.msra.mxu0 0.0
    %1481 = vmatpush.msra.mxu0 0.0
    %1482 = vmatpush.msra.mxu0 0.0
    %1483 = vmatpush.msra.mxu0 0.0
    %1484 = vmatpush.msra.mxu0 0.0
    %1485 = vmatpush.msra.mxu0 0.0
    %1486 = vmatpush.msra.mxu0 0.0
    %1487 = vmatpush.msra.mxu0 0.0
    %1488 = vmatpush.msra.mxu0 0.0
    %1489 = vmatpush.msra.mxu0 0.0
    %1490 = vmatpush.msra.mxu0 %v1469
    %1491 = vmatmul.f32.gmra.mxu0 %v1473
    %v1492 = vpop.f32.mrf.mxu0
    %v1493 = vadd.f32 0.0, %v1492
    %1494 = vdwg.mxu0
    %v1495 = vmul.f32 %v1469, %v1469
    %1496 = vmatpush.msra.mxu0 0.0
    %1497 = vmatpush.msra.mxu0 0.0
    %1498 = vmatpush.msra.mxu0 0.0
    %1499 = vmatpush.msra.mxu0 0.0
    %1500 = vmatpush.msra.mxu0 0.0
    %1501 = vmatpush.msra.mxu0 0.0
    %1502 = vmatpush.msra.mxu0 0.0
    %1503 = vmatpush.msra.mxu0 0.0
    %1504 = vmatpush.msra.mxu0 0.0
    %1505 = vmatpush.msra.mxu0 0.0
    %1506 = vmatpush.msra.mxu0 0.0
    %1507 = vmatpush.msra.mxu0 0.0
    %1508 = vmatpush.msra.mxu0 0.0
    %1509 = vmatpush.msra.mxu0 0.0
    %1510 = vmatpush.msra.mxu0 0.0
    %1511 = vmatpush.msra.mxu0 %v1495
    %1512 = vmatmul.f32.gmra.mxu0 %v1473
    %v1513 = vpop.f32.mrf.mxu0
    %v1514 = vadd.f32 0.0, %v1513
    %1515 = vdwg.mxu0
    %v1516 = vld [vmem:[#allocation7] sm:$0xff]
    %v1517 = vld [vmem:[#allocation7 + $0x8] sm:$0xff]
    %v1518 = vld [vmem:[#allocation7 + $0x10] sm:$0xff]
    %v1519 = vld [vmem:[#allocation7 + $0x18] sm:$0xff]
    %v1520 = vld [vmem:[#allocation7 + $0x20] sm:$0xff]
    %v1521 = vld [vmem:[#allocation7 + $0x28] sm:$0xff]
    %v1522 = vld [vmem:[#allocation7 + $0x30] sm:$0xff]
    %v1523 = vld [vmem:[#allocation7 + $0x38] sm:$0xff]
    %v1524 = vld [vmem:[#allocation7 + $0x40] sm:$0xff]
    %v1525 = vld [vmem:[#allocation7 + $0x48] sm:$0xff]
    %v1526 = vld [vmem:[#allocation7 + $0x50] sm:$0xff]
    %v1527 = vld [vmem:[#allocation7 + $0x58] sm:$0xff]
    %v1528 = vld [vmem:[#allocation7 + $0x60] sm:$0xff]
    %v1529 = vld [vmem:[#allocation7 + $0x68] sm:$0xff]
    %v1530 = vld [vmem:[#allocation7 + $0x70] sm:$0xff]
    %v1531 = vld [vmem:[#allocation7 + $0x78] sm:$0xff]
    %1532 = vmatpush.msra.mxu0 %v1531
    %1533 = vmatpush.msra.mxu0 %v1530
    %1534 = vmatpush.msra.mxu0 %v1529
    %1535 = vmatpush.msra.mxu0 %v1528
    %1536 = vmatpush.msra.mxu0 %v1527
    %1537 = vmatpush.msra.mxu0 %v1526
    %1538 = vmatpush.msra.mxu0 %v1525
    %1539 = vmatpush.msra.mxu0 %v1524
    %1540 = vmatpush.msra.mxu0 %v1523
    %1541 = vmatpush.msra.mxu0 %v1522
    %1542 = vmatpush.msra.mxu0 %v1521
    %1543 = vmatpush.msra.mxu0 %v1520
    %1544 = vmatpush.msra.mxu0 %v1519
    %1545 = vmatpush.msra.mxu0 %v1518
    %1546 = vmatpush.msra.mxu0 %v1517
    %1547 = vmatpush.msra.mxu0 %v1516
    %1548 = vmatmul.f32.gmra.mxu0 %v1493
    %v1549 = vpop.f32.mrf.mxu0
    %v1550 = vadd.f32 0.0, %v1549
    %1551 = vdwg.mxu0
    %v1552 = vmul.f32 %v1550, 0.03125
    %1553 = vmatpush.msra.mxu0 %v1531
    %1554 = vmatpush.msra.mxu0 %v1530
    %1555 = vmatpush.msra.mxu0 %v1529
    %1556 = vmatpush.msra.mxu0 %v1528
    %1557 = vmatpush.msra.mxu0 %v1527
    %1558 = vmatpush.msra.mxu0 %v1526
    %1559 = vmatpush.msra.mxu0 %v1525
    %1560 = vmatpush.msra.mxu0 %v1524
    %1561 = vmatpush.msra.mxu0 %v1523
    %1562 = vmatpush.msra.mxu0 %v1522
    %1563 = vmatpush.msra.mxu0 %v1521
    %1564 = vmatpush.msra.mxu0 %v1520
    %1565 = vmatpush.msra.mxu0 %v1519
    %1566 = vmatpush.msra.mxu0 %v1518
    %1567 = vmatpush.msra.mxu0 %v1517
    %1568 = vmatpush.msra.mxu0 %v1516
    %1569 = vmatmul.f32.gmra.mxu0 %v1514
    %v1570 = vpop.f32.mrf.mxu0
    %v1571 = vadd.f32 0.0, %v1570
    %1572 = vdwg.mxu0
    %v1573 = vmul.f32 %v1571, 0.03125
    %v1574 = vmul.f32 %v1552, %v1552
    %v1575 = vsub.f32 %v1573, %v1574
    %v1576 = vld [vmem:[%s10] sm:$0x1]
    %v1577 = vadd.f32 %v1575, 1e-05
    %v1578 = vrsqrt.pop %v1577
    %v1579 = vmul.f32 %v1578, %v1577
    %v1580 = vmul.f32 %v1579, %v1578
    %v1581 = vmul.f32 0.5, %v1580
    %v1582 = vsub.f32 1.5, %v1581
    %v1583 = vmul.f32 %v1578, %v1582
    %vm1584 = vweird.f32 %v1577
    %vm1585 = vweird.f32 %v1578
    %vm1586 = vmor %vm1584, %vm1585
    %v1587 = vsel %vm1586, %v1578, %v1583
    %v1588 = vmul.f32 %v1576, %v1587
    %v1589 = vld [vmem:[%s11] sm:$0x1]
    %v1590 = vmul.f32 %v1552, %v1588
    %v1591 = vsub.f32 %v1589, %v1590
    %v1593 = vperm.slane %v1588, 0
    %v1595 = vmul.f32 %v1469, %v1593
    %v1597 = vperm.slane %v1591, 0
    %v1599 = vadd.f32 %v1595, %v1597
    %vm1600 = vcmp.ge.f32.partialorder %v1599, 0.0
    %v1601 = vmul.f32 %v1599, 0.2
    %v1602 = vsel %vm1600, %v1599, %v1601
    %1603 = vst [vmem:[#allocation4] sm:$0xff] 0.0
    %1604 = vst [vmem:[#allocation4 + $0x8] sm:$0xf] 0.0
    %1605 = vst [vmem:[#allocation4 + $0x1] sm:$0xf] %v1602
    %1606 = vst [vmem:[#allocation4 + $0x3] sm:$0xf0] %v1602
    %v1607 = vld [vmem:[#allocation4] ss:$2 sm:$0x3]
    %s1608 = scalar_lea.vmem [#allocation4], 6
    %v1609 = vld [vmem:[%s1608] ss:$2 sm:$0x3]
    %v1611 = vrot.slane %v1609, 6
    %vm1613 = vcmask 1041408
    %v1614 = vsel %vm1613, %v1607, %v1611
    %s1615 = scalar_lea.vmem [#allocation4], 1
    %v1616 = vld [vmem:[%s1615] ss:$2 sm:$0x3]
    %s1617 = scalar_lea.vmem [#allocation4], 7
    %v1618 = vld [vmem:[%s1617] ss:$2 sm:$0x3]
    %v1620 = vrot.slane %v1618, 6
    %v1622 = vsel %vm1613, %v1616, %v1620
    %s1623 = scalar_lea.vmem [#allocation4], 2
    %v1624 = vld [vmem:[%s1623] ss:$2 sm:$0x3]
    %s1625 = scalar_lea.vmem [#allocation4], 8
    %v1626 = vld [vmem:[%s1625] ss:$2 sm:$0x3]
    %v1628 = vrot.slane %v1626, 6
    %v1630 = vsel %vm1613, %v1624, %v1628
    %s1631 = scalar_lea.vmem [#allocation4], 3
    %v1632 = vld [vmem:[%s1631] ss:$2 sm:$0x3]
    %s1633 = scalar_lea.vmem [#allocation4], 9
    %v1634 = vld [vmem:[%s1633] ss:$2 sm:$0x3]
    %v1636 = vrot.slane %v1634, 6
    %v1638 = vsel %vm1613, %v1632, %v1636
    %v1639 = vpack.c.bf16 %v1614, %v1614
    %v1640 = vpack.c.bf16 %v1622, %v1622
    %v1641 = vpack.c.bf16 %v1630, %v1630
    %v1642 = vpack.c.bf16 %v1638, %v1638
    %v1643 = vld [vmem:[#allocation9] sm:$0xf]
    %v1644 = vld [vmem:[#allocation9 + $0x4] sm:$0xf]
    %v1645 = vld [vmem:[#allocation9 + $0x8] sm:$0xf]
    %v1646 = vld [vmem:[#allocation9 + $0xc] sm:$0xf]
    %v1647 = vld [vmem:[#allocation9 + $0x10] sm:$0xf]
    %v1648 = vld [vmem:[#allocation9 + $0x14] sm:$0xf]
    %v1649 = vld [vmem:[#allocation9 + $0x18] sm:$0xf]
    %v1650 = vld [vmem:[#allocation9 + $0x1c] sm:$0xf]
    %v1651 = vld [vmem:[#allocation9 + $0x20] sm:$0xf]
    %v1652 = vld [vmem:[#allocation9 + $0x24] sm:$0xf]
    %v1653 = vld [vmem:[#allocation9 + $0x28] sm:$0xf]
    %v1654 = vld [vmem:[#allocation9 + $0x2c] sm:$0xf]
    %v1655 = vld [vmem:[#allocation9 + $0x30] sm:$0xf]
    %v1656 = vld [vmem:[#allocation9 + $0x34] sm:$0xf]
    %v1657 = vld [vmem:[#allocation9 + $0x38] sm:$0xf]
    %v1658 = vld [vmem:[#allocation9 + $0x3c] sm:$0xf]
    %v1659 = vld [vmem:[#allocation9 + $0x40] sm:$0xf]
    %v1660 = vld [vmem:[#allocation9 + $0x44] sm:$0xf]
    %v1661 = vld [vmem:[#allocation9 + $0x48] sm:$0xf]
    %v1662 = vld [vmem:[#allocation9 + $0x4c] sm:$0xf]
    %v1663 = vld [vmem:[#allocation9 + $0x50] sm:$0xf]
    %v1664 = vld [vmem:[#allocation9 + $0x54] sm:$0xf]
    %v1665 = vld [vmem:[#allocation9 + $0x58] sm:$0xf]
    %v1666 = vld [vmem:[#allocation9 + $0x5c] sm:$0xf]
    %v1667 = vld [vmem:[#allocation9 + $0x60] sm:$0xf]
    %v1668 = vld [vmem:[#allocation9 + $0x64] sm:$0xf]
    %v1669 = vld [vmem:[#allocation9 + $0x68] sm:$0xf]
    %v1670 = vld [vmem:[#allocation9 + $0x6c] sm:$0xf]
    %v1671 = vld [vmem:[#allocation9 + $0x70] sm:$0xf]
    %v1672 = vld [vmem:[#allocation9 + $0x74] sm:$0xf]
    %v1673 = vld [vmem:[#allocation9 + $0x78] sm:$0xf]
    %v1674 = vld [vmem:[#allocation9 + $0x7c] sm:$0xf]
    %v1675 = vld [vmem:[#allocation9 + $0x80] sm:$0xf]
    %v1676 = vld [vmem:[#allocation9 + $0x84] sm:$0xf]
    %v1677 = vld [vmem:[#allocation9 + $0x88] sm:$0xf]
    %v1678 = vld [vmem:[#allocation9 + $0x8c] sm:$0xf]
    %v1679 = vld [vmem:[#allocation9 + $0x90] sm:$0xf]
    %v1680 = vld [vmem:[#allocation9 + $0x94] sm:$0xf]
    %v1681 = vld [vmem:[#allocation9 + $0x98] sm:$0xf]
    %v1682 = vld [vmem:[#allocation9 + $0x9c] sm:$0xf]
    %v1683 = vld [vmem:[#allocation9 + $0xa0] sm:$0xf]
    %v1684 = vld [vmem:[#allocation9 + $0xa4] sm:$0xf]
    %v1685 = vld [vmem:[#allocation9 + $0xa8] sm:$0xf]
    %v1686 = vld [vmem:[#allocation9 + $0xac] sm:$0xf]
    %v1687 = vld [vmem:[#allocation9 + $0xb0] sm:$0xf]
    %v1688 = vld [vmem:[#allocation9 + $0xb4] sm:$0xf]
    %v1689 = vld [vmem:[#allocation9 + $0xb8] sm:$0xf]
    %v1690 = vld [vmem:[#allocation9 + $0xbc] sm:$0xf]
    %v1691 = vld [vmem:[#allocation9 + $0xc0] sm:$0xf]
    %v1692 = vld [vmem:[#allocation9 + $0xc4] sm:$0xf]
    %v1693 = vld [vmem:[#allocation9 + $0xc8] sm:$0xf]
    %v1694 = vld [vmem:[#allocation9 + $0xcc] sm:$0xf]
    %v1695 = vld [vmem:[#allocation9 + $0xd0] sm:$0xf]
    %v1696 = vld [vmem:[#allocation9 + $0xd4] sm:$0xf]
    %v1697 = vld [vmem:[#allocation9 + $0xd8] sm:$0xf]
    %v1698 = vld [vmem:[#allocation9 + $0xdc] sm:$0xf]
    %v1699 = vld [vmem:[#allocation9 + $0xe0] sm:$0xf]
    %v1700 = vld [vmem:[#allocation9 + $0xe4] sm:$0xf]
    %v1701 = vld [vmem:[#allocation9 + $0xe8] sm:$0xf]
    %v1702 = vld [vmem:[#allocation9 + $0xec] sm:$0xf]
    %v1703 = vld [vmem:[#allocation9 + $0xf0] sm:$0xf]
    %v1704 = vld [vmem:[#allocation9 + $0xf4] sm:$0xf]
    %v1705 = vld [vmem:[#allocation9 + $0xf8] sm:$0xf]
    %v1706 = vld [vmem:[#allocation9 + $0xfc] sm:$0xf]
    %v1771 = vunpack.c.l.b16 %v1643
    %v1772 = vunpack.c.l.b16 %v1644
    %v1773 = vunpack.c.l.b16 %v1645
    %v1774 = vunpack.c.l.b16 %v1646
    %v1775 = vunpack.c.l.b16 %v1647
    %v1776 = vunpack.c.l.b16 %v1648
    %v1777 = vunpack.c.l.b16 %v1649
    %v1778 = vunpack.c.l.b16 %v1650
    %v1779 = vunpack.c.l.b16 %v1651
    %v1780 = vunpack.c.l.b16 %v1652
    %v1781 = vunpack.c.l.b16 %v1653
    %v1782 = vunpack.c.l.b16 %v1654
    %v1783 = vunpack.c.l.b16 %v1655
    %v1784 = vunpack.c.l.b16 %v1656
    %v1785 = vunpack.c.l.b16 %v1657
    %v1786 = vunpack.c.l.b16 %v1658
    %v1787 = vunpack.c.l.b16 %v1659
    %v1788 = vunpack.c.l.b16 %v1660
    %v1789 = vunpack.c.l.b16 %v1661
    %v1790 = vunpack.c.l.b16 %v1662
    %v1791 = vunpack.c.l.b16 %v1663
    %v1792 = vunpack.c.l.b16 %v1664
    %v1793 = vunpack.c.l.b16 %v1665
    %v1794 = vunpack.c.l.b16 %v1666
    %v1795 = vunpack.c.l.b16 %v1667
    %v1796 = vunpack.c.l.b16 %v1668
    %v1797 = vunpack.c.l.b16 %v1669
    %v1798 = vunpack.c.l.b16 %v1670
    %v1799 = vunpack.c.l.b16 %v1671
    %v1800 = vunpack.c.l.b16 %v1672
    %v1801 = vunpack.c.l.b16 %v1673
    %v1802 = vunpack.c.l.b16 %v1674
    %v1803 = vunpack.c.l.b16 %v1675
    %v1804 = vunpack.c.l.b16 %v1676
    %v1805 = vunpack.c.l.b16 %v1677
    %v1806 = vunpack.c.l.b16 %v1678
    %v1807 = vunpack.c.l.b16 %v1679
    %v1808 = vunpack.c.l.b16 %v1680
    %v1809 = vunpack.c.l.b16 %v1681
    %v1810 = vunpack.c.l.b16 %v1682
    %v1811 = vunpack.c.l.b16 %v1683
    %v1812 = vunpack.c.l.b16 %v1684
    %v1813 = vunpack.c.l.b16 %v1685
    %v1814 = vunpack.c.l.b16 %v1686
    %v1815 = vunpack.c.l.b16 %v1687
    %v1816 = vunpack.c.l.b16 %v1688
    %v1817 = vunpack.c.l.b16 %v1689
    %v1818 = vunpack.c.l.b16 %v1690
    %v1819 = vunpack.c.l.b16 %v1691
    %v1820 = vunpack.c.l.b16 %v1692
    %v1821 = vunpack.c.l.b16 %v1693
    %v1822 = vunpack.c.l.b16 %v1694
    %v1823 = vunpack.c.l.b16 %v1695
    %v1824 = vunpack.c.l.b16 %v1696
    %v1825 = vunpack.c.l.b16 %v1697
    %v1826 = vunpack.c.l.b16 %v1698
    %v1827 = vunpack.c.l.b16 %v1699
    %v1828 = vunpack.c.l.b16 %v1700
    %v1829 = vunpack.c.l.b16 %v1701
    %v1830 = vunpack.c.l.b16 %v1702
    %v1831 = vunpack.c.l.b16 %v1703
    %v1832 = vunpack.c.l.b16 %v1704
    %v1833 = vunpack.c.l.b16 %v1705
    %v1834 = vunpack.c.l.b16 %v1706
    %v1835 = vpack.c.b16 %v1772, %v1771
    %v1836 = vpack.c.b16 %v1774, %v1773
    %v1837 = vpack.c.b16 %v1776, %v1775
    %v1838 = vpack.c.b16 %v1778, %v1777
    %v1839 = vpack.c.b16 %v1780, %v1779
    %v1840 = vpack.c.b16 %v1782, %v1781
    %v1841 = vpack.c.b16 %v1784, %v1783
    %v1842 = vpack.c.b16 %v1786, %v1785
    %v1843 = vpack.c.b16 %v1788, %v1787
    %v1844 = vpack.c.b16 %v1790, %v1789
    %v1845 = vpack.c.b16 %v1792, %v1791
    %v1846 = vpack.c.b16 %v1794, %v1793
    %v1847 = vpack.c.b16 %v1796, %v1795
    %v1848 = vpack.c.b16 %v1798, %v1797
    %v1849 = vpack.c.b16 %v1800, %v1799
    %v1850 = vpack.c.b16 %v1802, %v1801
    %v1851 = vpack.c.b16 %v1804, %v1803
    %v1852 = vpack.c.b16 %v1806, %v1805
    %v1853 = vpack.c.b16 %v1808, %v1807
    %v1854 = vpack.c.b16 %v1810, %v1809
    %v1855 = vpack.c.b16 %v1812, %v1811
    %v1856 = vpack.c.b16 %v1814, %v1813
    %v1857 = vpack.c.b16 %v1816, %v1815
    %v1858 = vpack.c.b16 %v1818, %v1817
    %v1859 = vpack.c.b16 %v1820, %v1819
    %v1860 = vpack.c.b16 %v1822, %v1821
    %v1861 = vpack.c.b16 %v1824, %v1823
    %v1862 = vpack.c.b16 %v1826, %v1825
    %v1863 = vpack.c.b16 %v1828, %v1827
    %v1864 = vpack.c.b16 %v1830, %v1829
    %v1865 = vpack.c.b16 %v1832, %v1831
    %v1866 = vpack.c.b16 %v1834, %v1833
    %1899 = vmatpush.bf16.msra.mxu0 %v1842
    %1900 = vmatpush.bf16.msra.mxu0 %v1841
    %1901 = vmatpush.bf16.msra.mxu0 %v1840
    %1902 = vmatpush.bf16.msra.mxu0 %v1839
    %1903 = vmatpush.bf16.msra.mxu0 %v1838
    %1904 = vmatpush.bf16.msra.mxu0 %v1837
    %1905 = vmatpush.bf16.msra.mxu0 %v1836
    %1906 = vmatpush.bf16.msra.mxu0 %v1835
    %1907 = vmatmul.bf16.gmra.mxu0 %v1639
    %v1908 = vpop.f32.mrf.mxu0
    %v1909 = vadd.f32 0.0, %v1908
    %v1910 = vpop.f32.mrf.mxu0
    %1911 = vdwg.mxu0
    %1912 = vmatpush.bf16.msra.mxu0 %v1850
    %1913 = vmatpush.bf16.msra.mxu0 %v1849
    %1914 = vmatpush.bf16.msra.mxu0 %v1848
    %1915 = vmatpush.bf16.msra.mxu0 %v1847
    %1916 = vmatpush.bf16.msra.mxu0 %v1846
    %1917 = vmatpush.bf16.msra.mxu0 %v1845
    %1918 = vmatpush.bf16.msra.mxu0 %v1844
    %1919 = vmatpush.bf16.msra.mxu0 %v1843
    %1920 = vmatmul.bf16.gmra.mxu0 %v1640
    %v1921 = vpop.f32.mrf.mxu0
    %v1922 = vadd.f32 %v1909, %v1921
    %v1923 = vpop.f32.mrf.mxu0
    %1924 = vdwg.mxu0
    %1925 = vmatpush.bf16.msra.mxu0 %v1858
    %1926 = vmatpush.bf16.msra.mxu0 %v1857
    %1927 = vmatpush.bf16.msra.mxu0 %v1856
    %1928 = vmatpush.bf16.msra.mxu0 %v1855
    %1929 = vmatpush.bf16.msra.mxu0 %v1854
    %1930 = vmatpush.bf16.msra.mxu0 %v1853
    %1931 = vmatpush.bf16.msra.mxu0 %v1852
    %1932 = vmatpush.bf16.msra.mxu0 %v1851
    %1933 = vmatmul.bf16.gmra.mxu0 %v1641
    %v1934 = vpop.f32.mrf.mxu0
    %v1935 = vadd.f32 %v1922, %v1934
    %v1936 = vpop.f32.mrf.mxu0
    %1937 = vdwg.mxu0
    %1938 = vmatpush.bf16.msra.mxu0 %v1866
    %1939 = vmatpush.bf16.msra.mxu0 %v1865
    %1940 = vmatpush.bf16.msra.mxu0 %v1864
    %1941 = vmatpush.bf16.msra.mxu0 %v1863
    %1942 = vmatpush.bf16.msra.mxu0 %v1862
    %1943 = vmatpush.bf16.msra.mxu0 %v1861
    %1944 = vmatpush.bf16.msra.mxu0 %v1860
    %1945 = vmatpush.bf16.msra.mxu0 %v1859
    %1946 = vmatmul.bf16.gmra.mxu0 %v1642
    %v1947 = vpop.f32.mrf.mxu0
    %v1948 = vadd.f32 %v1935, %v1947
    %v1949 = vpop.f32.mrf.mxu0
    %1950 = vdwg.mxu0
    %vm1951 = vcmask 31744
    %v1952 = vsel %vm1951, 1.0, 0
    %v1955 = vsel %vm1134, %v1948, 0
    %1957 = vmatpush.msra.mxu0 0.0
    %1958 = vmatpush.msra.mxu0 0.0
    %1959 = vmatpush.msra.mxu0 0.0
    %1960 = vmatpush.msra.mxu0 0.0
    %1961 = vmatpush.msra.mxu0 0.0
    %1962 = vmatpush.msra.mxu0 0.0
    %1963 = vmatpush.msra.mxu0 0.0
    %1964 = vmatpush.msra.mxu0 0.0
    %1965 = vmatpush.msra.mxu0 0.0
    %1966 = vmatpush.msra.mxu0 0.0
    %1967 = vmatpush.msra.mxu0 0.0
    %1968 = vmatpush.msra.mxu0 0.0
    %1969 = vmatpush.msra.mxu0 0.0
    %1970 = vmatpush.msra.mxu0 0.0
    %1971 = vmatpush.msra.mxu0 0.0
    %1972 = vmatpush.msra.mxu0 %v1955
    %1973 = vmatmul.f32.gmra.mxu0 %v1952
    %v1974 = vpop.f32.mrf.mxu0
    %v1975 = vadd.f32 0.0, %v1974
    %1976 = vdwg.mxu0
    %v1977 = vmul.f32 %v1948, %v1948
    %v1979 = vsel %vm1134, %v1977, 0
    %1981 = vmatpush.msra.mxu0 0.0
    %1982 = vmatpush.msra.mxu0 0.0
    %1983 = vmatpush.msra.mxu0 0.0
    %1984 = vmatpush.msra.mxu0 0.0
    %1985 = vmatpush.msra.mxu0 0.0
    %1986 = vmatpush.msra.mxu0 0.0
    %1987 = vmatpush.msra.mxu0 0.0
    %1988 = vmatpush.msra.mxu0 0.0
    %1989 = vmatpush.msra.mxu0 0.0
    %1990 = vmatpush.msra.mxu0 0.0
    %1991 = vmatpush.msra.mxu0 0.0
    %1992 = vmatpush.msra.mxu0 0.0
    %1993 = vmatpush.msra.mxu0 0.0
    %1994 = vmatpush.msra.mxu0 0.0
    %1995 = vmatpush.msra.mxu0 0.0
    %1996 = vmatpush.msra.mxu0 %v1979
    %1997 = vmatmul.f32.gmra.mxu0 %v1952
    %v1998 = vpop.f32.mrf.mxu0
    %v1999 = vadd.f32 0.0, %v1998
    %2000 = vdwg.mxu0
    %v2001 = vld [vmem:[#allocation10] sm:$0xff]
    %v2002 = vld [vmem:[#allocation10 + $0x8] sm:$0xff]
    %v2003 = vld [vmem:[#allocation10 + $0x10] sm:$0xff]
    %v2004 = vld [vmem:[#allocation10 + $0x18] sm:$0xff]
    %v2005 = vld [vmem:[#allocation10 + $0x20] sm:$0xff]
    %v2006 = vld [vmem:[#allocation10 + $0x28] sm:$0xff]
    %v2007 = vld [vmem:[#allocation10 + $0x30] sm:$0xff]
    %v2008 = vld [vmem:[#allocation10 + $0x38] sm:$0xff]
    %v2009 = vld [vmem:[#allocation10 + $0x40] sm:$0xff]
    %v2010 = vld [vmem:[#allocation10 + $0x48] sm:$0xff]
    %v2011 = vld [vmem:[#allocation10 + $0x50] sm:$0xff]
    %v2012 = vld [vmem:[#allocation10 + $0x58] sm:$0xff]
    %v2013 = vld [vmem:[#allocation10 + $0x60] sm:$0xff]
    %v2014 = vld [vmem:[#allocation10 + $0x68] sm:$0xff]
    %v2015 = vld [vmem:[#allocation10 + $0x70] sm:$0xff]
    %v2016 = vld [vmem:[#allocation10 + $0x78] sm:$0xff]
    %2017 = vmatpush.msra.mxu0 %v2016
    %2018 = vmatpush.msra.mxu0 %v2015
    %2019 = vmatpush.msra.mxu0 %v2014
    %2020 = vmatpush.msra.mxu0 %v2013
    %2021 = vmatpush.msra.mxu0 %v2012
    %2022 = vmatpush.msra.mxu0 %v2011
    %2023 = vmatpush.msra.mxu0 %v2010
    %2024 = vmatpush.msra.mxu0 %v2009
    %2025 = vmatpush.msra.mxu0 %v2008
    %2026 = vmatpush.msra.mxu0 %v2007
    %2027 = vmatpush.msra.mxu0 %v2006
    %2028 = vmatpush.msra.mxu0 %v2005
    %2029 = vmatpush.msra.mxu0 %v2004
    %2030 = vmatpush.msra.mxu0 %v2003
    %2031 = vmatpush.msra.mxu0 %v2002
    %2032 = vmatpush.msra.mxu0 %v2001
    %2033 = vmatmul.f32.gmra.mxu0 %v1975
    %v2034 = vpop.f32.mrf.mxu0
    %v2035 = vadd.f32 0.0, %v2034
    %2036 = vdwg.mxu0
    %v2037 = vmul.f32 %v2035, 0.125
    %2038 = vmatpush.msra.mxu0 %v2016
    %2039 = vmatpush.msra.mxu0 %v2015
    %2040 = vmatpush.msra.mxu0 %v2014
    %2041 = vmatpush.msra.mxu0 %v2013
    %2042 = vmatpush.msra.mxu0 %v2012
    %2043 = vmatpush.msra.mxu0 %v2011
    %2044 = vmatpush.msra.mxu0 %v2010
    %2045 = vmatpush.msra.mxu0 %v2009
    %2046 = vmatpush.msra.mxu0 %v2008
    %2047 = vmatpush.msra.mxu0 %v2007
    %2048 = vmatpush.msra.mxu0 %v2006
    %2049 = vmatpush.msra.mxu0 %v2005
    %2050 = vmatpush.msra.mxu0 %v2004
    %2051 = vmatpush.msra.mxu0 %v2003
    %2052 = vmatpush.msra.mxu0 %v2002
    %2053 = vmatpush.msra.mxu0 %v2001
    %2054 = vmatmul.f32.gmra.mxu0 %v1999
    %v2055 = vpop.f32.mrf.mxu0
    %v2056 = vadd.f32 0.0, %v2055
    %2057 = vdwg.mxu0
    %v2058 = vmul.f32 %v2056, 0.125
    %v2059 = vmul.f32 %v2037, %v2037
    %v2060 = vsub.f32 %v2058, %v2059
    %v2061 = vld [vmem:[%s14] sm:$0x1]
    %v2062 = vadd.f32 %v2060, 1e-05
    %v2063 = vrsqrt.pop %v2062
    %v2064 = vmul.f32 %v2063, %v2062
    %v2065 = vmul.f32 %v2064, %v2063
    %v2066 = vmul.f32 0.5, %v2065
    %v2067 = vsub.f32 1.5, %v2066
    %v2068 = vmul.f32 %v2063, %v2067
    %vm2069 = vweird.f32 %v2062
    %vm2070 = vweird.f32 %v2063
    %vm2071 = vmor %vm2069, %vm2070
    %v2072 = vsel %vm2071, %v2063, %v2068
    %v2073 = vmul.f32 %v2061, %v2072
    %v2074 = vld [vmem:[%s15] sm:$0x1]
    %v2075 = vmul.f32 %v2037, %v2073
    %v2076 = vsub.f32 %v2074, %v2075
    %v2078 = vperm.slane %v2073, 0
    %v2080 = vmul.f32 %v1948, %v2078
    %v2082 = vperm.slane %v2076, 0
    %v2084 = vadd.f32 %v2080, %v2082
    %vm2085 = vcmp.ge.f32.partialorder %v2084, 0.0
    %v2086 = vmul.f32 %v2084, 0.2
    %v2087 = vsel %vm2085, %v2084, %v2086
    %v2088 = vld [vmem:[%s17] sm:$0xf]
    %v2089 = vmul.f32 %v2087, %v2088
    %v2090 = vld [vmem:[%s18] sm:$0x3]
    %v2092 = vsel %vm1951, %v2090, 0
    %v2095 = vsel %vm1134, %v2089, 0
    %2097 = vmatpush.msra.mxu0 0.0
    %2098 = vmatpush.msra.mxu0 0.0
    %2099 = vmatpush.msra.mxu0 0.0
    %2100 = vmatpush.msra.mxu0 0.0
    %2101 = vmatpush.msra.mxu0 0.0
    %2102 = vmatpush.msra.mxu0 0.0
    %2103 = vmatpush.msra.mxu0 0.0
    %2104 = vmatpush.msra.mxu0 0.0
    %2105 = vmatpush.msra.mxu0 0.0
    %2106 = vmatpush.msra.mxu0 0.0
    %2107 = vmatpush.msra.mxu0 0.0
    %2108 = vmatpush.msra.mxu0 0.0
    %2109 = vmatpush.msra.mxu0 0.0
    %2110 = vmatpush.msra.mxu0 0.0
    %2111 = vmatpush.msra.mxu0 0.0
    %2112 = vmatpush.msra.mxu0 %v2095
    %2113 = vmatmul.f32.gmra.mxu0 %v2092
    %v2114 = vpop.f32.mrf.mxu0
    %v2115 = vadd.f32 0.0, %v2114
    %2116 = vdwg.mxu0
    %v2117 = vsel %vm1613, %v2115, 0.0
    %2118 = vadd.xlane.f32.xlu0 %v2117
    %v2119 = vpop.xlane.xlu0 %2118
    %vm2120 = vcmask 1024
    %2121 = vst.msk [vmem:[%s19] sm:$0x3] %vm2120, %v2119
    // Predicated region
    $region94: #{cifar_disc_forward.1} parent=1 // pred_check
      _
    $region95: #{cifar_disc_forward.1} parent=1 // pred_check_branch
      %2123 = sbr.rel (0) target = $region97
    $region96: #{cifar_disc_forward.1} parent=1 // pred_region
      _
    $region97: #{cifar_disc_forward.1} parent=1 // pred_fallthru
      _
    // Predicated region
    $region98: #{cifar_disc_forward.1} parent=1 // pred_check
      _
    $region99: #{cifar_disc_forward.1} parent=1 // pred_check_branch
      %2125 = sbr.rel (0) target = $region101
    $region100: #{cifar_disc_forward.1} parent=1 // pred_region
      _
    $region101: #{cifar_disc_forward.1} parent=1 // pred_fallthru
      _
    %2126 = vsyncpa [#allocation6], 1
    %2127 = vsyncpa [#allocation8], 1
    %2128 = vsyncpa [#allocation11], 1

</llo_original>
